<compile_context>
chip_gen: v6e
topology: v6e:2x2x1
jax: 0.10.0
libtpu: 0.0.40
codegen_flags: <defaults>
</compile_context>

<pallas_src>
import functools

import jax
import jax.numpy as jnp
from jax import lax
from jax.experimental import pallas as pl
from jax.experimental.pallas import tpu as pltpu


def lstm_fc_kernel(emb_ref, len_ref, w_ih_ref, w_hh_ref, b_ref,
                   w_fc_ref, b_fc_ref, out_ref, gx_ref,
                   *, hidden_size, seq_len, batch):
    """Single-invocation fused LSTM recurrence + final Linear.

    emb_ref : (T*B, E)   time-major embeddings (row t*B + b)
    len_ref : (B, 1)     int32 sequence lengths (sorted descending)
    w_ih_ref: (E, 4H)    input->gates weights (transposed PyTorch weight_ih_l0)
    w_hh_ref: (H, 4H)    hidden->gates weights (transposed PyTorch weight_hh_l0)
    b_ref   : (1, 4H)    b_ih + b_hh
    w_fc_ref: (H, 2)     final linear weight (transposed)
    b_fc_ref: (1, 2)     final linear bias
    out_ref : (B, 2)     prediction
    gx_ref  : (T, B, 4H) VMEM scratch holding the hoisted input projection
    """
    H, T, B = hidden_size, seq_len, batch

    # ---- hoisted, time-independent input projection: ONE MXU matmul for all T steps.
    gx2d = (jnp.dot(emb_ref[...], w_ih_ref[...],
                    preferred_element_type=jnp.float32)
            + b_ref[...])                              # (T*B, 4H), gate order [i, f, g, o]
    # Stage time-major into VMEM scratch with static slices (cheap, fully static).
    for t in range(T):
        gx_ref[t] = gx2d[t * B:(t + 1) * B, :]

    lengths = len_ref[...]                             # (B, 1) int32, hoisted
    w_hh = w_hh_ref[...]                               # (H, 4H), resident across the loop

    def step(t, carry):
        h, c = carry
        gates = gx_ref[t] + jnp.dot(h, w_hh,
                                    preferred_element_type=jnp.float32)   # (B, 4H)
        i_g = jax.nn.sigmoid(gates[:, 0 * H:1 * H])
        f_g = jax.nn.sigmoid(gates[:, 1 * H:2 * H])
        g_g = jnp.tanh(gates[:, 2 * H:3 * H])
        o_g = jax.nn.sigmoid(gates[:, 3 * H:4 * H])
        c_new = f_g * c + i_g * g_g
        h_new = o_g * jnp.tanh(c_new)
        # packed-sequence semantics: rows past their length keep their last state
        live = t < lengths                             # (B, 1) bool
        return jnp.where(live, h_new, h), jnp.where(live, c_new, c)

    h0 = jnp.zeros((B, H), jnp.float32)
    c0 = jnp.zeros((B, H), jnp.float32)
    h, _ = lax.fori_loop(0, T, step, (h0, c0), unroll=True)

    # fused final Linear(hidden_size, 2); Dropout(p=0.5) is identity in eval mode.
    out_ref[...] = (jnp.dot(h, w_fc_ref[...], preferred_element_type=jnp.float32)
                    + b_fc_ref[...])


def simple_lstm_forward(text, lengths, params):
    """text: (B, T) int32 token ids; lengths: (B,) int32 sorted descending."""
    emb_table = params["embedding"]                    # (V, E), row 0 == 0 (padding_idx)
    w_ih, w_hh, b = params["w_ih"], params["w_hh"], params["b"]
    w_fc, b_fc = params["w_fc"], params["b_fc"]

    B, T = text.shape
    H = w_hh.shape[0]

    # Embedding gather (glue) done directly in time-major order: transposing the tiny
    # int32 id matrix is free and the slab is written once in the layout the kernel
    # wants -> no full-tensor transpose round trip through HBM before the Pallas call.
    emb_tm2d = jnp.take(emb_table, text.T.reshape(-1), axis=0)     # (T*B, E)
    len2d = lengths.astype(jnp.int32).reshape(B, 1)

    vmem = pl.BlockSpec(memory_space=pltpu.MemorySpace.VMEM)
    out = pl.pallas_call(
        functools.partial(lstm_fc_kernel, hidden_size=H, seq_len=T, batch=B),
        out_shape=jax.ShapeDtypeStruct((B, 2), jnp.float32),
        in_specs=[vmem] * 7,
        out_specs=vmem,
        scratch_shapes=[pltpu.VMEM((T, B, 4 * H), jnp.float32)],   # hoisted input projection
    )(emb_tm2d, len2d, w_ih, w_hh, b, w_fc, b_fc)

    # TODO(synk): Dropout(p=0.5) train-mode RNG masking not implemented (eval = identity).
    # PyTorch applies fc to hidden_state of shape (1, B, H) -> prediction (1, B, 2).
    return out[None]                                   # (1, B, 2)


def reference_forward(text, lengths, params):
    """Pure-JAX reference with identical semantics (for verification)."""
    emb_table = params["embedding"]
    w_ih, w_hh, b = params["w_ih"], params["w_hh"], params["b"]
    w_fc, b_fc = params["w_fc"], params["b_fc"]
    H = w_hh.shape[0]
    emb = jnp.take(emb_table, text, axis=0)            # (B, T, E)
    B, T, _ = emb.shape
    h = jnp.zeros((B, H), jnp.float32)
    c = jnp.zeros((B, H), jnp.float32)
    for t in range(T):
        x = emb[:, t, :]
        gates = x @ w_ih + h @ w_hh + b
        i_g = jax.nn.sigmoid(gates[:, 0 * H:1 * H])
        f_g = jax.nn.sigmoid(gates[:, 1 * H:2 * H])
        g_g = jnp.tanh(gates[:, 2 * H:3 * H])
        o_g = jax.nn.sigmoid(gates[:, 3 * H:4 * H])
        c_new = f_g * c + i_g * g_g
        h_new = o_g * jnp.tanh(c_new)
        mask = (t < lengths)[:, None]
        h = jnp.where(mask, h_new, h)
        c = jnp.where(mask, c_new, c)
    return (h @ w_fc + b_fc)[None]                     # (1, B, 2)


if __name__ == "__main__":
    V, E, H = 50, 16, 32     # vocab_size, embedding_dim, hidden_size
    B, T = 2, 8

    key = jax.random.PRNGKey(0)
    keys = jax.random.split(key, 8)

    emb_table = 0.1 * jax.random.normal(keys[0], (V, E), jnp.float32)
    emb_table = emb_table.at[0].set(0.0)               # padding_idx=0
    params = {
        "embedding": emb_table,
        "w_ih": 0.1 * jax.random.normal(keys[1], (E, 4 * H), jnp.float32),
        "w_hh": 0.1 * jax.random.normal(keys[2], (H, 4 * H), jnp.float32),
        "b":    0.1 * jax.random.normal(keys[3], (1, 4 * H), jnp.float32),
        "w_fc": 0.1 * jax.random.normal(keys[4], (H, 2), jnp.float32),
        "b_fc": 0.1 * jax.random.normal(keys[5], (1, 2), jnp.float32),
    }

    # enforce_sorted=True -> lengths sorted descending
    lengths = jnp.array([8, 5], dtype=jnp.int32)
    text = jax.random.randint(keys[6], (B, T), 1, V, dtype=jnp.int32)
    pos = jnp.arange(T, dtype=jnp.int32)[None, :]
    text = jnp.where(pos < lengths[:, None], text, 0)  # zero-pad beyond lengths

    pred = jax.block_until_ready(simple_lstm_forward(text, lengths, params))
    ref = jax.block_until_ready(reference_forward(text, lengths, params))

    assert pred.shape == (1, B, 2), pred.shape
    assert jnp.allclose(pred, ref, atol=1e-5, rtol=1e-5), (pred, ref)
    print("KERNEL_OK")
</pallas_src>

<mosaic_0001>
module attributes {stable_mosaic.version = 11 : i64} {
  func.func @lstm_fc_kernel(%arg0: memref<16x16xf32, #tpu.memory_space<vmem>>, %arg1: memref<2x1xi32, #tpu.memory_space<vmem>>, %arg2: memref<16x128xf32, #tpu.memory_space<vmem>>, %arg3: memref<32x128xf32, #tpu.memory_space<vmem>>, %arg4: memref<1x128xf32, #tpu.memory_space<vmem>>, %arg5: memref<32x2xf32, #tpu.memory_space<vmem>>, %arg6: memref<1x2xf32, #tpu.memory_space<vmem>>, %arg7: memref<2x2xf32, #tpu.memory_space<vmem>>, %arg8: memref<8x2x128xf32, #tpu.memory_space<vmem>>) attributes {dimension_semantics = [], scalar_prefetch = 0 : i64, scratch_operands = 1 : i64, tpu.core_type = #tpu.core_type<tc>} {
    %c0 = arith.constant 0 : index
    %c0_0 = arith.constant 0 : index
    %0 = vector.load %arg0[%c0, %c0_0] : memref<16x16xf32, #tpu.memory_space<vmem>>, vector<16x16xf32>
    %c0_1 = arith.constant 0 : index
    %c0_2 = arith.constant 0 : index
    %1 = vector.load %arg2[%c0_1, %c0_2] : memref<16x128xf32, #tpu.memory_space<vmem>>, vector<16x128xf32>
    %cst = arith.constant dense<0.000000e+00> : vector<16x128xf32>
    %2 = tpu.matmul %0, %1, %cst {dimension_numbers = #tpu.dot_dimension_numbers<[1], [0], [0], [1], [0, 0, 1, 1], [], []>} : vector<16x16xf32>, vector<16x128xf32>, vector<16x128xf32> -> vector<16x128xf32>
    %c0_3 = arith.constant 0 : index
    %c0_4 = arith.constant 0 : index
    %3 = vector.load %arg4[%c0_3, %c0_4] : memref<1x128xf32, #tpu.memory_space<vmem>>, vector<1x128xf32>
    %4 = vector.broadcast %3 : vector<1x128xf32> to vector<16x128xf32>
    %5 = arith.addf %2, %4 : vector<16x128xf32>
    %6 = vector.extract_strided_slice %5 {offsets = [0, 0], sizes = [2, 128], strides = [1, 1]} : vector<16x128xf32> to vector<2x128xf32>
    %c0_5 = arith.constant 0 : index
    %c0_6 = arith.constant 0 : index
    %c0_7 = arith.constant 0 : index
    %7 = vector.load %arg8[%c0_5, %c0_6, %c0_7] : memref<8x2x128xf32, #tpu.memory_space<vmem>>, vector<1x2x128xf32>
    %8 = vector.shape_cast %7 : vector<1x2x128xf32> to vector<2x128xf32>
    %9 = vector.shape_cast %6 : vector<2x128xf32> to vector<1x2x128xf32>
    tpu.vector_store %arg8[%c0_5, %c0_6, %c0_7], %9 {strides = array<i32>} : memref<8x2x128xf32, #tpu.memory_space<vmem>>, vector<1x2x128xf32>,
    %10 = vector.extract_strided_slice %5 {offsets = [2, 0], sizes = [2, 128], strides = [1, 1]} : vector<16x128xf32> to vector<2x128xf32>
    %c1 = arith.constant 1 : index
    %c0_8 = arith.constant 0 : index
    %c0_9 = arith.constant 0 : index
    %11 = vector.load %arg8[%c1, %c0_8, %c0_9] : memref<8x2x128xf32, #tpu.memory_space<vmem>>, vector<1x2x128xf32>
    %12 = vector.shape_cast %11 : vector<1x2x128xf32> to vector<2x128xf32>
    %13 = vector.shape_cast %10 : vector<2x128xf32> to vector<1x2x128xf32>
    tpu.vector_store %arg8[%c1, %c0_8, %c0_9], %13 {strides = array<i32>} : memref<8x2x128xf32, #tpu.memory_space<vmem>>, vector<1x2x128xf32>,
    %14 = vector.extract_strided_slice %5 {offsets = [4, 0], sizes = [2, 128], strides = [1, 1]} : vector<16x128xf32> to vector<2x128xf32>
    %c2 = arith.constant 2 : index
    %c0_10 = arith.constant 0 : index
    %c0_11 = arith.constant 0 : index
    %15 = vector.load %arg8[%c2, %c0_10, %c0_11] : memref<8x2x128xf32, #tpu.memory_space<vmem>>, vector<1x2x128xf32>
    %16 = vector.shape_cast %15 : vector<1x2x128xf32> to vector<2x128xf32>
    %17 = vector.shape_cast %14 : vector<2x128xf32> to vector<1x2x128xf32>
    tpu.vector_store %arg8[%c2, %c0_10, %c0_11], %17 {strides = array<i32>} : memref<8x2x128xf32, #tpu.memory_space<vmem>>, vector<1x2x128xf32>,
    %18 = vector.extract_strided_slice %5 {offsets = [6, 0], sizes = [2, 128], strides = [1, 1]} : vector<16x128xf32> to vector<2x128xf32>
    %c3 = arith.constant 3 : index
    %c0_12 = arith.constant 0 : index
    %c0_13 = arith.constant 0 : index
    %19 = vector.load %arg8[%c3, %c0_12, %c0_13] : memref<8x2x128xf32, #tpu.memory_space<vmem>>, vector<1x2x128xf32>
    %20 = vector.shape_cast %19 : vector<1x2x128xf32> to vector<2x128xf32>
    %21 = vector.shape_cast %18 : vector<2x128xf32> to vector<1x2x128xf32>
    tpu.vector_store %arg8[%c3, %c0_12, %c0_13], %21 {strides = array<i32>} : memref<8x2x128xf32, #tpu.memory_space<vmem>>, vector<1x2x128xf32>,
    %22 = vector.extract_strided_slice %5 {offsets = [8, 0], sizes = [2, 128], strides = [1, 1]} : vector<16x128xf32> to vector<2x128xf32>
    %c4 = arith.constant 4 : index
    %c0_14 = arith.constant 0 : index
    %c0_15 = arith.constant 0 : index
    %23 = vector.load %arg8[%c4, %c0_14, %c0_15] : memref<8x2x128xf32, #tpu.memory_space<vmem>>, vector<1x2x128xf32>
    %24 = vector.shape_cast %23 : vector<1x2x128xf32> to vector<2x128xf32>
    %25 = vector.shape_cast %22 : vector<2x128xf32> to vector<1x2x128xf32>
    tpu.vector_store %arg8[%c4, %c0_14, %c0_15], %25 {strides = array<i32>} : memref<8x2x128xf32, #tpu.memory_space<vmem>>, vector<1x2x128xf32>,
    %26 = vector.extract_strided_slice %5 {offsets = [10, 0], sizes = [2, 128], strides = [1, 1]} : vector<16x128xf32> to vector<2x128xf32>
    %c5 = arith.constant 5 : index
    %c0_16 = arith.constant 0 : index
    %c0_17 = arith.constant 0 : index
    %27 = vector.load %arg8[%c5, %c0_16, %c0_17] : memref<8x2x128xf32, #tpu.memory_space<vmem>>, vector<1x2x128xf32>
    %28 = vector.shape_cast %27 : vector<1x2x128xf32> to vector<2x128xf32>
    %29 = vector.shape_cast %26 : vector<2x128xf32> to vector<1x2x128xf32>
    tpu.vector_store %arg8[%c5, %c0_16, %c0_17], %29 {strides = array<i32>} : memref<8x2x128xf32, #tpu.memory_space<vmem>>, vector<1x2x128xf32>,
    %30 = vector.extract_strided_slice %5 {offsets = [12, 0], sizes = [2, 128], strides = [1, 1]} : vector<16x128xf32> to vector<2x128xf32>
    %c6 = arith.constant 6 : index
    %c0_18 = arith.constant 0 : index
    %c0_19 = arith.constant 0 : index
    %31 = vector.load %arg8[%c6, %c0_18, %c0_19] : memref<8x2x128xf32, #tpu.memory_space<vmem>>, vector<1x2x128xf32>
    %32 = vector.shape_cast %31 : vector<1x2x128xf32> to vector<2x128xf32>
    %33 = vector.shape_cast %30 : vector<2x128xf32> to vector<1x2x128xf32>
    tpu.vector_store %arg8[%c6, %c0_18, %c0_19], %33 {strides = array<i32>} : memref<8x2x128xf32, #tpu.memory_space<vmem>>, vector<1x2x128xf32>,
    %34 = vector.extract_strided_slice %5 {offsets = [14, 0], sizes = [2, 128], strides = [1, 1]} : vector<16x128xf32> to vector<2x128xf32>
    %c7 = arith.constant 7 : index
    %c0_20 = arith.constant 0 : index
    %c0_21 = arith.constant 0 : index
    %35 = vector.load %arg8[%c7, %c0_20, %c0_21] : memref<8x2x128xf32, #tpu.memory_space<vmem>>, vector<1x2x128xf32>
    %36 = vector.shape_cast %35 : vector<1x2x128xf32> to vector<2x128xf32>
    %37 = vector.shape_cast %34 : vector<2x128xf32> to vector<1x2x128xf32>
    tpu.vector_store %arg8[%c7, %c0_20, %c0_21], %37 {strides = array<i32>} : memref<8x2x128xf32, #tpu.memory_space<vmem>>, vector<1x2x128xf32>,
    %c0_22 = arith.constant 0 : index
    %c0_23 = arith.constant 0 : index
    %38 = vector.load %arg1[%c0_22, %c0_23] : memref<2x1xi32, #tpu.memory_space<vmem>>, vector<2x1xi32>
    %c0_24 = arith.constant 0 : index
    %c0_25 = arith.constant 0 : index
    %39 = vector.load %arg3[%c0_24, %c0_25] : memref<32x128xf32, #tpu.memory_space<vmem>>, vector<32x128xf32>
    %cst_26 = arith.constant 0.000000e+00 : f32
    %40 = vector.broadcast %cst_26 : f32 to vector<2x32xf32>
    %cst_27 = arith.constant 0.000000e+00 : f32
    %41 = vector.broadcast %cst_27 : f32 to vector<2x32xf32>
    %c0_i32 = arith.constant 0 : i32
    %42 = arith.index_cast %c0_i32 : i32 to index
    %c0_28 = arith.constant 0 : index
    %c0_29 = arith.constant 0 : index
    %43 = vector.load %arg8[%42, %c0_28, %c0_29] : memref<8x2x128xf32, #tpu.memory_space<vmem>>, vector<1x2x128xf32>
    %44 = vector.shape_cast %43 : vector<1x2x128xf32> to vector<2x128xf32>
    %cst_30 = arith.constant dense<0.000000e+00> : vector<2x128xf32>
    %45 = tpu.matmul %40, %39, %cst_30 {dimension_numbers = #tpu.dot_dimension_numbers<[1], [0], [0], [1], [0, 0, 1, 1], [], []>} : vector<2x32xf32>, vector<32x128xf32>, vector<2x128xf32> -> vector<2x128xf32>
    %46 = arith.addf %44, %45 : vector<2x128xf32>
    %47 = vector.extract_strided_slice %46 {offsets = [0, 0], sizes = [2, 32], strides = [1, 1]} : vector<2x128xf32> to vector<2x32xf32>
    %48 = arith.negf %47 : vector<2x32xf32>
    %49 = math.exp %48 : vector<2x32xf32>
    %cst_31 = arith.constant 1.000000e+00 : f32
    %50 = vector.broadcast %cst_31 : f32 to vector<2x32xf32>
    %51 = arith.addf %50, %49 : vector<2x32xf32>
    %52 = arith.divf %50, %51 : vector<2x32xf32>
    %53 = vector.extract_strided_slice %46 {offsets = [0, 32], sizes = [2, 32], strides = [1, 1]} : vector<2x128xf32> to vector<2x32xf32>
    %54 = arith.negf %53 : vector<2x32xf32>
    %55 = math.exp %54 : vector<2x32xf32>
    %cst_32 = arith.constant 1.000000e+00 : f32
    %56 = vector.broadcast %cst_32 : f32 to vector<2x32xf32>
    %57 = arith.addf %56, %55 : vector<2x32xf32>
    %58 = arith.divf %56, %57 : vector<2x32xf32>
    %59 = vector.extract_strided_slice %46 {offsets = [0, 64], sizes = [2, 32], strides = [1, 1]} : vector<2x128xf32> to vector<2x32xf32>
    %60 = math.tanh %59 : vector<2x32xf32>
    %61 = vector.extract_strided_slice %46 {offsets = [0, 96], sizes = [2, 32], strides = [1, 1]} : vector<2x128xf32> to vector<2x32xf32>
    %62 = arith.negf %61 : vector<2x32xf32>
    %63 = math.exp %62 : vector<2x32xf32>
    %cst_33 = arith.constant 1.000000e+00 : f32
    %64 = vector.broadcast %cst_33 : f32 to vector<2x32xf32>
    %65 = arith.addf %64, %63 : vector<2x32xf32>
    %66 = arith.divf %64, %65 : vector<2x32xf32>
    %67 = arith.mulf %58, %41 : vector<2x32xf32>
    %68 = arith.mulf %52, %60 : vector<2x32xf32>
    %69 = arith.addf %67, %68 : vector<2x32xf32>
    %70 = math.tanh %69 : vector<2x32xf32>
    %71 = arith.mulf %66, %70 : vector<2x32xf32>
    %72 = vector.broadcast %c0_i32 : i32 to vector<2x1xi32>
    %73 = arith.cmpi slt, %72, %38 : vector<2x1xi32>
    %74 = vector.shape_cast %73 : vector<2x1xi1> to vector<2x1xi1>
    %75 = vector.broadcast %74 : vector<2x1xi1> to vector<2x32xi1>
    %76 = arith.select %75, %71, %40 : vector<2x32xi1>, vector<2x32xf32>
    %77 = vector.shape_cast %73 : vector<2x1xi1> to vector<2x1xi1>
    %78 = vector.broadcast %77 : vector<2x1xi1> to vector<2x32xi1>
    %79 = arith.select %78, %69, %41 : vector<2x32xi1>, vector<2x32xf32>
    %c1_i32 = arith.constant 1 : i32
    %80 = arith.index_cast %c1_i32 : i32 to index
    %c0_34 = arith.constant 0 : index
    %c0_35 = arith.constant 0 : index
    %81 = vector.load %arg8[%80, %c0_34, %c0_35] : memref<8x2x128xf32, #tpu.memory_space<vmem>>, vector<1x2x128xf32>
    %82 = vector.shape_cast %81 : vector<1x2x128xf32> to vector<2x128xf32>
    %cst_36 = arith.constant dense<0.000000e+00> : vector<2x128xf32>
    %83 = tpu.matmul %76, %39, %cst_36 {dimension_numbers = #tpu.dot_dimension_numbers<[1], [0], [0], [1], [0, 0, 1, 1], [], []>} : vector<2x32xf32>, vector<32x128xf32>, vector<2x128xf32> -> vector<2x128xf32>
    %84 = arith.addf %82, %83 : vector<2x128xf32>
    %85 = vector.extract_strided_slice %84 {offsets = [0, 0], sizes = [2, 32], strides = [1, 1]} : vector<2x128xf32> to vector<2x32xf32>
    %86 = arith.negf %85 : vector<2x32xf32>
    %87 = math.exp %86 : vector<2x32xf32>
    %cst_37 = arith.constant 1.000000e+00 : f32
    %88 = vector.broadcast %cst_37 : f32 to vector<2x32xf32>
    %89 = arith.addf %88, %87 : vector<2x32xf32>
    %90 = arith.divf %88, %89 : vector<2x32xf32>
    %91 = vector.extract_strided_slice %84 {offsets = [0, 32], sizes = [2, 32], strides = [1, 1]} : vector<2x128xf32> to vector<2x32xf32>
    %92 = arith.negf %91 : vector<2x32xf32>
    %93 = math.exp %92 : vector<2x32xf32>
    %cst_38 = arith.constant 1.000000e+00 : f32
    %94 = vector.broadcast %cst_38 : f32 to vector<2x32xf32>
    %95 = arith.addf %94, %93 : vector<2x32xf32>
    %96 = arith.divf %94, %95 : vector<2x32xf32>
    %97 = vector.extract_strided_slice %84 {offsets = [0, 64], sizes = [2, 32], strides = [1, 1]} : vector<2x128xf32> to vector<2x32xf32>
    %98 = math.tanh %97 : vector<2x32xf32>
    %99 = vector.extract_strided_slice %84 {offsets = [0, 96], sizes = [2, 32], strides = [1, 1]} : vector<2x128xf32> to vector<2x32xf32>
    %100 = arith.negf %99 : vector<2x32xf32>
    %101 = math.exp %100 : vector<2x32xf32>
    %cst_39 = arith.constant 1.000000e+00 : f32
    %102 = vector.broadcast %cst_39 : f32 to vector<2x32xf32>
    %103 = arith.addf %102, %101 : vector<2x32xf32>
    %104 = arith.divf %102, %103 : vector<2x32xf32>
    %105 = arith.mulf %96, %79 : vector<2x32xf32>
    %106 = arith.mulf %90, %98 : vector<2x32xf32>
    %107 = arith.addf %105, %106 : vector<2x32xf32>
    %108 = math.tanh %107 : vector<2x32xf32>
    %109 = arith.mulf %104, %108 : vector<2x32xf32>
    %110 = vector.broadcast %c1_i32 : i32 to vector<2x1xi32>
    %111 = arith.cmpi slt, %110, %38 : vector<2x1xi32>
    %112 = vector.shape_cast %111 : vector<2x1xi1> to vector<2x1xi1>
    %113 = vector.broadcast %112 : vector<2x1xi1> to vector<2x32xi1>
    %114 = arith.select %113, %109, %76 : vector<2x32xi1>, vector<2x32xf32>
    %115 = vector.shape_cast %111 : vector<2x1xi1> to vector<2x1xi1>
    %116 = vector.broadcast %115 : vector<2x1xi1> to vector<2x32xi1>
    %117 = arith.select %116, %107, %79 : vector<2x32xi1>, vector<2x32xf32>
    %c2_i32 = arith.constant 2 : i32
    %118 = arith.index_cast %c2_i32 : i32 to index
    %c0_40 = arith.constant 0 : index
    %c0_41 = arith.constant 0 : index
    %119 = vector.load %arg8[%118, %c0_40, %c0_41] : memref<8x2x128xf32, #tpu.memory_space<vmem>>, vector<1x2x128xf32>
    %120 = vector.shape_cast %119 : vector<1x2x128xf32> to vector<2x128xf32>
    %cst_42 = arith.constant dense<0.000000e+00> : vector<2x128xf32>
    %121 = tpu.matmul %114, %39, %cst_42 {dimension_numbers = #tpu.dot_dimension_numbers<[1], [0], [0], [1], [0, 0, 1, 1], [], []>} : vector<2x32xf32>, vector<32x128xf32>, vector<2x128xf32> -> vector<2x128xf32>
    %122 = arith.addf %120, %121 : vector<2x128xf32>
    %123 = vector.extract_strided_slice %122 {offsets = [0, 0], sizes = [2, 32], strides = [1, 1]} : vector<2x128xf32> to vector<2x32xf32>
    %124 = arith.negf %123 : vector<2x32xf32>
    %125 = math.exp %124 : vector<2x32xf32>
    %cst_43 = arith.constant 1.000000e+00 : f32
    %126 = vector.broadcast %cst_43 : f32 to vector<2x32xf32>
    %127 = arith.addf %126, %125 : vector<2x32xf32>
    %128 = arith.divf %126, %127 : vector<2x32xf32>
    %129 = vector.extract_strided_slice %122 {offsets = [0, 32], sizes = [2, 32], strides = [1, 1]} : vector<2x128xf32> to vector<2x32xf32>
    %130 = arith.negf %129 : vector<2x32xf32>
    %131 = math.exp %130 : vector<2x32xf32>
    %cst_44 = arith.constant 1.000000e+00 : f32
    %132 = vector.broadcast %cst_44 : f32 to vector<2x32xf32>
    %133 = arith.addf %132, %131 : vector<2x32xf32>
    %134 = arith.divf %132, %133 : vector<2x32xf32>
    %135 = vector.extract_strided_slice %122 {offsets = [0, 64], sizes = [2, 32], strides = [1, 1]} : vector<2x128xf32> to vector<2x32xf32>
    %136 = math.tanh %135 : vector<2x32xf32>
    %137 = vector.extract_strided_slice %122 {offsets = [0, 96], sizes = [2, 32], strides = [1, 1]} : vector<2x128xf32> to vector<2x32xf32>
    %138 = arith.negf %137 : vector<2x32xf32>
    %139 = math.exp %138 : vector<2x32xf32>
    %cst_45 = arith.constant 1.000000e+00 : f32
    %140 = vector.broadcast %cst_45 : f32 to vector<2x32xf32>
    %141 = arith.addf %140, %139 : vector<2x32xf32>
    %142 = arith.divf %140, %141 : vector<2x32xf32>
    %143 = arith.mulf %134, %117 : vector<2x32xf32>
    %144 = arith.mulf %128, %136 : vector<2x32xf32>
    %145 = arith.addf %143, %144 : vector<2x32xf32>
    %146 = math.tanh %145 : vector<2x32xf32>
    %147 = arith.mulf %142, %146 : vector<2x32xf32>
    %148 = vector.broadcast %c2_i32 : i32 to vector<2x1xi32>
    %149 = arith.cmpi slt, %148, %38 : vector<2x1xi32>
    %150 = vector.shape_cast %149 : vector<2x1xi1> to vector<2x1xi1>
    %151 = vector.broadcast %150 : vector<2x1xi1> to vector<2x32xi1>
    %152 = arith.select %151, %147, %114 : vector<2x32xi1>, vector<2x32xf32>
    %153 = vector.shape_cast %149 : vector<2x1xi1> to vector<2x1xi1>
    %154 = vector.broadcast %153 : vector<2x1xi1> to vector<2x32xi1>
    %155 = arith.select %154, %145, %117 : vector<2x32xi1>, vector<2x32xf32>
    %c3_i32 = arith.constant 3 : i32
    %156 = arith.index_cast %c3_i32 : i32 to index
    %c0_46 = arith.constant 0 : index
    %c0_47 = arith.constant 0 : index
    %157 = vector.load %arg8[%156, %c0_46, %c0_47] : memref<8x2x128xf32, #tpu.memory_space<vmem>>, vector<1x2x128xf32>
    %158 = vector.shape_cast %157 : vector<1x2x128xf32> to vector<2x128xf32>
    %cst_48 = arith.constant dense<0.000000e+00> : vector<2x128xf32>
    %159 = tpu.matmul %152, %39, %cst_48 {dimension_numbers = #tpu.dot_dimension_numbers<[1], [0], [0], [1], [0, 0, 1, 1], [], []>} : vector<2x32xf32>, vector<32x128xf32>, vector<2x128xf32> -> vector<2x128xf32>
    %160 = arith.addf %158, %159 : vector<2x128xf32>
    %161 = vector.extract_strided_slice %160 {offsets = [0, 0], sizes = [2, 32], strides = [1, 1]} : vector<2x128xf32> to vector<2x32xf32>
    %162 = arith.negf %161 : vector<2x32xf32>
    %163 = math.exp %162 : vector<2x32xf32>
    %cst_49 = arith.constant 1.000000e+00 : f32
    %164 = vector.broadcast %cst_49 : f32 to vector<2x32xf32>
    %165 = arith.addf %164, %163 : vector<2x32xf32>
    %166 = arith.divf %164, %165 : vector<2x32xf32>
    %167 = vector.extract_strided_slice %160 {offsets = [0, 32], sizes = [2, 32], strides = [1, 1]} : vector<2x128xf32> to vector<2x32xf32>
    %168 = arith.negf %167 : vector<2x32xf32>
    %169 = math.exp %168 : vector<2x32xf32>
    %cst_50 = arith.constant 1.000000e+00 : f32
    %170 = vector.broadcast %cst_50 : f32 to vector<2x32xf32>
    %171 = arith.addf %170, %169 : vector<2x32xf32>
    %172 = arith.divf %170, %171 : vector<2x32xf32>
    %173 = vector.extract_strided_slice %160 {offsets = [0, 64], sizes = [2, 32], strides = [1, 1]} : vector<2x128xf32> to vector<2x32xf32>
    %174 = math.tanh %173 : vector<2x32xf32>
    %175 = vector.extract_strided_slice %160 {offsets = [0, 96], sizes = [2, 32], strides = [1, 1]} : vector<2x128xf32> to vector<2x32xf32>
    %176 = arith.negf %175 : vector<2x32xf32>
    %177 = math.exp %176 : vector<2x32xf32>
    %cst_51 = arith.constant 1.000000e+00 : f32
    %178 = vector.broadcast %cst_51 : f32 to vector<2x32xf32>
    %179 = arith.addf %178, %177 : vector<2x32xf32>
    %180 = arith.divf %178, %179 : vector<2x32xf32>
    %181 = arith.mulf %172, %155 : vector<2x32xf32>
    %182 = arith.mulf %166, %174 : vector<2x32xf32>
    %183 = arith.addf %181, %182 : vector<2x32xf32>
    %184 = math.tanh %183 : vector<2x32xf32>
    %185 = arith.mulf %180, %184 : vector<2x32xf32>
    %186 = vector.broadcast %c3_i32 : i32 to vector<2x1xi32>
    %187 = arith.cmpi slt, %186, %38 : vector<2x1xi32>
    %188 = vector.shape_cast %187 : vector<2x1xi1> to vector<2x1xi1>
    %189 = vector.broadcast %188 : vector<2x1xi1> to vector<2x32xi1>
    %190 = arith.select %189, %185, %152 : vector<2x32xi1>, vector<2x32xf32>
    %191 = vector.shape_cast %187 : vector<2x1xi1> to vector<2x1xi1>
    %192 = vector.broadcast %191 : vector<2x1xi1> to vector<2x32xi1>
    %193 = arith.select %192, %183, %155 : vector<2x32xi1>, vector<2x32xf32>
    %c4_i32 = arith.constant 4 : i32
    %194 = arith.index_cast %c4_i32 : i32 to index
    %c0_52 = arith.constant 0 : index
    %c0_53 = arith.constant 0 : index
    %195 = vector.load %arg8[%194, %c0_52, %c0_53] : memref<8x2x128xf32, #tpu.memory_space<vmem>>, vector<1x2x128xf32>
    %196 = vector.shape_cast %195 : vector<1x2x128xf32> to vector<2x128xf32>
    %cst_54 = arith.constant dense<0.000000e+00> : vector<2x128xf32>
    %197 = tpu.matmul %190, %39, %cst_54 {dimension_numbers = #tpu.dot_dimension_numbers<[1], [0], [0], [1], [0, 0, 1, 1], [], []>} : vector<2x32xf32>, vector<32x128xf32>, vector<2x128xf32> -> vector<2x128xf32>
    %198 = arith.addf %196, %197 : vector<2x128xf32>
    %199 = vector.extract_strided_slice %198 {offsets = [0, 0], sizes = [2, 32], strides = [1, 1]} : vector<2x128xf32> to vector<2x32xf32>
    %200 = arith.negf %199 : vector<2x32xf32>
    %201 = math.exp %200 : vector<2x32xf32>
    %cst_55 = arith.constant 1.000000e+00 : f32
    %202 = vector.broadcast %cst_55 : f32 to vector<2x32xf32>
    %203 = arith.addf %202, %201 : vector<2x32xf32>
    %204 = arith.divf %202, %203 : vector<2x32xf32>
    %205 = vector.extract_strided_slice %198 {offsets = [0, 32], sizes = [2, 32], strides = [1, 1]} : vector<2x128xf32> to vector<2x32xf32>
    %206 = arith.negf %205 : vector<2x32xf32>
    %207 = math.exp %206 : vector<2x32xf32>
    %cst_56 = arith.constant 1.000000e+00 : f32
    %208 = vector.broadcast %cst_56 : f32 to vector<2x32xf32>
    %209 = arith.addf %208, %207 : vector<2x32xf32>
    %210 = arith.divf %208, %209 : vector<2x32xf32>
    %211 = vector.extract_strided_slice %198 {offsets = [0, 64], sizes = [2, 32], strides = [1, 1]} : vector<2x128xf32> to vector<2x32xf32>
    %212 = math.tanh %211 : vector<2x32xf32>
    %213 = vector.extract_strided_slice %198 {offsets = [0, 96], sizes = [2, 32], strides = [1, 1]} : vector<2x128xf32> to vector<2x32xf32>
    %214 = arith.negf %213 : vector<2x32xf32>
    %215 = math.exp %214 : vector<2x32xf32>
    %cst_57 = arith.constant 1.000000e+00 : f32
    %216 = vector.broadcast %cst_57 : f32 to vector<2x32xf32>
    %217 = arith.addf %216, %215 : vector<2x32xf32>
    %218 = arith.divf %216, %217 : vector<2x32xf32>
    %219 = arith.mulf %210, %193 : vector<2x32xf32>
    %220 = arith.mulf %204, %212 : vector<2x32xf32>
    %221 = arith.addf %219, %220 : vector<2x32xf32>
    %222 = math.tanh %221 : vector<2x32xf32>
    %223 = arith.mulf %218, %222 : vector<2x32xf32>
    %224 = vector.broadcast %c4_i32 : i32 to vector<2x1xi32>
    %225 = arith.cmpi slt, %224, %38 : vector<2x1xi32>
    %226 = vector.shape_cast %225 : vector<2x1xi1> to vector<2x1xi1>
    %227 = vector.broadcast %226 : vector<2x1xi1> to vector<2x32xi1>
    %228 = arith.select %227, %223, %190 : vector<2x32xi1>, vector<2x32xf32>
    %229 = vector.shape_cast %225 : vector<2x1xi1> to vector<2x1xi1>
    %230 = vector.broadcast %229 : vector<2x1xi1> to vector<2x32xi1>
    %231 = arith.select %230, %221, %193 : vector<2x32xi1>, vector<2x32xf32>
    %c5_i32 = arith.constant 5 : i32
    %232 = arith.index_cast %c5_i32 : i32 to index
    %c0_58 = arith.constant 0 : index
    %c0_59 = arith.constant 0 : index
    %233 = vector.load %arg8[%232, %c0_58, %c0_59] : memref<8x2x128xf32, #tpu.memory_space<vmem>>, vector<1x2x128xf32>
    %234 = vector.shape_cast %233 : vector<1x2x128xf32> to vector<2x128xf32>
    %cst_60 = arith.constant dense<0.000000e+00> : vector<2x128xf32>
    %235 = tpu.matmul %228, %39, %cst_60 {dimension_numbers = #tpu.dot_dimension_numbers<[1], [0], [0], [1], [0, 0, 1, 1], [], []>} : vector<2x32xf32>, vector<32x128xf32>, vector<2x128xf32> -> vector<2x128xf32>
    %236 = arith.addf %234, %235 : vector<2x128xf32>
    %237 = vector.extract_strided_slice %236 {offsets = [0, 0], sizes = [2, 32], strides = [1, 1]} : vector<2x128xf32> to vector<2x32xf32>
    %238 = arith.negf %237 : vector<2x32xf32>
    %239 = math.exp %238 : vector<2x32xf32>
    %cst_61 = arith.constant 1.000000e+00 : f32
    %240 = vector.broadcast %cst_61 : f32 to vector<2x32xf32>
    %241 = arith.addf %240, %239 : vector<2x32xf32>
    %242 = arith.divf %240, %241 : vector<2x32xf32>
    %243 = vector.extract_strided_slice %236 {offsets = [0, 32], sizes = [2, 32], strides = [1, 1]} : vector<2x128xf32> to vector<2x32xf32>
    %244 = arith.negf %243 : vector<2x32xf32>
    %245 = math.exp %244 : vector<2x32xf32>
    %cst_62 = arith.constant 1.000000e+00 : f32
    %246 = vector.broadcast %cst_62 : f32 to vector<2x32xf32>
    %247 = arith.addf %246, %245 : vector<2x32xf32>
    %248 = arith.divf %246, %247 : vector<2x32xf32>
    %249 = vector.extract_strided_slice %236 {offsets = [0, 64], sizes = [2, 32], strides = [1, 1]} : vector<2x128xf32> to vector<2x32xf32>
    %250 = math.tanh %249 : vector<2x32xf32>
    %251 = vector.extract_strided_slice %236 {offsets = [0, 96], sizes = [2, 32], strides = [1, 1]} : vector<2x128xf32> to vector<2x32xf32>
    %252 = arith.negf %251 : vector<2x32xf32>
    %253 = math.exp %252 : vector<2x32xf32>
    %cst_63 = arith.constant 1.000000e+00 : f32
    %254 = vector.broadcast %cst_63 : f32 to vector<2x32xf32>
    %255 = arith.addf %254, %253 : vector<2x32xf32>
    %256 = arith.divf %254, %255 : vector<2x32xf32>
    %257 = arith.mulf %248, %231 : vector<2x32xf32>
    %258 = arith.mulf %242, %250 : vector<2x32xf32>
    %259 = arith.addf %257, %258 : vector<2x32xf32>
    %260 = math.tanh %259 : vector<2x32xf32>
    %261 = arith.mulf %256, %260 : vector<2x32xf32>
    %262 = vector.broadcast %c5_i32 : i32 to vector<2x1xi32>
    %263 = arith.cmpi slt, %262, %38 : vector<2x1xi32>
    %264 = vector.shape_cast %263 : vector<2x1xi1> to vector<2x1xi1>
    %265 = vector.broadcast %264 : vector<2x1xi1> to vector<2x32xi1>
    %266 = arith.select %265, %261, %228 : vector<2x32xi1>, vector<2x32xf32>
    %267 = vector.shape_cast %263 : vector<2x1xi1> to vector<2x1xi1>
    %268 = vector.broadcast %267 : vector<2x1xi1> to vector<2x32xi1>
    %269 = arith.select %268, %259, %231 : vector<2x32xi1>, vector<2x32xf32>
    %c6_i32 = arith.constant 6 : i32
    %270 = arith.index_cast %c6_i32 : i32 to index
    %c0_64 = arith.constant 0 : index
    %c0_65 = arith.constant 0 : index
    %271 = vector.load %arg8[%270, %c0_64, %c0_65] : memref<8x2x128xf32, #tpu.memory_space<vmem>>, vector<1x2x128xf32>
    %272 = vector.shape_cast %271 : vector<1x2x128xf32> to vector<2x128xf32>
    %cst_66 = arith.constant dense<0.000000e+00> : vector<2x128xf32>
    %273 = tpu.matmul %266, %39, %cst_66 {dimension_numbers = #tpu.dot_dimension_numbers<[1], [0], [0], [1], [0, 0, 1, 1], [], []>} : vector<2x32xf32>, vector<32x128xf32>, vector<2x128xf32> -> vector<2x128xf32>
    %274 = arith.addf %272, %273 : vector<2x128xf32>
    %275 = vector.extract_strided_slice %274 {offsets = [0, 0], sizes = [2, 32], strides = [1, 1]} : vector<2x128xf32> to vector<2x32xf32>
    %276 = arith.negf %275 : vector<2x32xf32>
    %277 = math.exp %276 : vector<2x32xf32>
    %cst_67 = arith.constant 1.000000e+00 : f32
    %278 = vector.broadcast %cst_67 : f32 to vector<2x32xf32>
    %279 = arith.addf %278, %277 : vector<2x32xf32>
    %280 = arith.divf %278, %279 : vector<2x32xf32>
    %281 = vector.extract_strided_slice %274 {offsets = [0, 32], sizes = [2, 32], strides = [1, 1]} : vector<2x128xf32> to vector<2x32xf32>
    %282 = arith.negf %281 : vector<2x32xf32>
    %283 = math.exp %282 : vector<2x32xf32>
    %cst_68 = arith.constant 1.000000e+00 : f32
    %284 = vector.broadcast %cst_68 : f32 to vector<2x32xf32>
    %285 = arith.addf %284, %283 : vector<2x32xf32>
    %286 = arith.divf %284, %285 : vector<2x32xf32>
    %287 = vector.extract_strided_slice %274 {offsets = [0, 64], sizes = [2, 32], strides = [1, 1]} : vector<2x128xf32> to vector<2x32xf32>
    %288 = math.tanh %287 : vector<2x32xf32>
    %289 = vector.extract_strided_slice %274 {offsets = [0, 96], sizes = [2, 32], strides = [1, 1]} : vector<2x128xf32> to vector<2x32xf32>
    %290 = arith.negf %289 : vector<2x32xf32>
    %291 = math.exp %290 : vector<2x32xf32>
    %cst_69 = arith.constant 1.000000e+00 : f32
    %292 = vector.broadcast %cst_69 : f32 to vector<2x32xf32>
    %293 = arith.addf %292, %291 : vector<2x32xf32>
    %294 = arith.divf %292, %293 : vector<2x32xf32>
    %295 = arith.mulf %286, %269 : vector<2x32xf32>
    %296 = arith.mulf %280, %288 : vector<2x32xf32>
    %297 = arith.addf %295, %296 : vector<2x32xf32>
    %298 = math.tanh %297 : vector<2x32xf32>
    %299 = arith.mulf %294, %298 : vector<2x32xf32>
    %300 = vector.broadcast %c6_i32 : i32 to vector<2x1xi32>
    %301 = arith.cmpi slt, %300, %38 : vector<2x1xi32>
    %302 = vector.shape_cast %301 : vector<2x1xi1> to vector<2x1xi1>
    %303 = vector.broadcast %302 : vector<2x1xi1> to vector<2x32xi1>
    %304 = arith.select %303, %299, %266 : vector<2x32xi1>, vector<2x32xf32>
    %305 = vector.shape_cast %301 : vector<2x1xi1> to vector<2x1xi1>
    %306 = vector.broadcast %305 : vector<2x1xi1> to vector<2x32xi1>
    %307 = arith.select %306, %297, %269 : vector<2x32xi1>, vector<2x32xf32>
    %c7_i32 = arith.constant 7 : i32
    %308 = arith.index_cast %c7_i32 : i32 to index
    %c0_70 = arith.constant 0 : index
    %c0_71 = arith.constant 0 : index
    %309 = vector.load %arg8[%308, %c0_70, %c0_71] : memref<8x2x128xf32, #tpu.memory_space<vmem>>, vector<1x2x128xf32>
    %310 = vector.shape_cast %309 : vector<1x2x128xf32> to vector<2x128xf32>
    %cst_72 = arith.constant dense<0.000000e+00> : vector<2x128xf32>
    %311 = tpu.matmul %304, %39, %cst_72 {dimension_numbers = #tpu.dot_dimension_numbers<[1], [0], [0], [1], [0, 0, 1, 1], [], []>} : vector<2x32xf32>, vector<32x128xf32>, vector<2x128xf32> -> vector<2x128xf32>
    %312 = arith.addf %310, %311 : vector<2x128xf32>
    %313 = vector.extract_strided_slice %312 {offsets = [0, 0], sizes = [2, 32], strides = [1, 1]} : vector<2x128xf32> to vector<2x32xf32>
    %314 = arith.negf %313 : vector<2x32xf32>
    %315 = math.exp %314 : vector<2x32xf32>
    %cst_73 = arith.constant 1.000000e+00 : f32
    %316 = vector.broadcast %cst_73 : f32 to vector<2x32xf32>
    %317 = arith.addf %316, %315 : vector<2x32xf32>
    %318 = arith.divf %316, %317 : vector<2x32xf32>
    %319 = vector.extract_strided_slice %312 {offsets = [0, 32], sizes = [2, 32], strides = [1, 1]} : vector<2x128xf32> to vector<2x32xf32>
    %320 = arith.negf %319 : vector<2x32xf32>
    %321 = math.exp %320 : vector<2x32xf32>
    %cst_74 = arith.constant 1.000000e+00 : f32
    %322 = vector.broadcast %cst_74 : f32 to vector<2x32xf32>
    %323 = arith.addf %322, %321 : vector<2x32xf32>
    %324 = arith.divf %322, %323 : vector<2x32xf32>
    %325 = vector.extract_strided_slice %312 {offsets = [0, 64], sizes = [2, 32], strides = [1, 1]} : vector<2x128xf32> to vector<2x32xf32>
    %326 = math.tanh %325 : vector<2x32xf32>
    %327 = vector.extract_strided_slice %312 {offsets = [0, 96], sizes = [2, 32], strides = [1, 1]} : vector<2x128xf32> to vector<2x32xf32>
    %328 = arith.negf %327 : vector<2x32xf32>
    %329 = math.exp %328 : vector<2x32xf32>
    %cst_75 = arith.constant 1.000000e+00 : f32
    %330 = vector.broadcast %cst_75 : f32 to vector<2x32xf32>
    %331 = arith.addf %330, %329 : vector<2x32xf32>
    %332 = arith.divf %330, %331 : vector<2x32xf32>
    %333 = arith.mulf %324, %307 : vector<2x32xf32>
    %334 = arith.mulf %318, %326 : vector<2x32xf32>
    %335 = arith.addf %333, %334 : vector<2x32xf32>
    %336 = math.tanh %335 : vector<2x32xf32>
    %337 = arith.mulf %332, %336 : vector<2x32xf32>
    %338 = vector.broadcast %c7_i32 : i32 to vector<2x1xi32>
    %339 = arith.cmpi slt, %338, %38 : vector<2x1xi32>
    %340 = vector.shape_cast %339 : vector<2x1xi1> to vector<2x1xi1>
    %341 = vector.broadcast %340 : vector<2x1xi1> to vector<2x32xi1>
    %342 = arith.select %341, %337, %304 : vector<2x32xi1>, vector<2x32xf32>
    %343 = vector.shape_cast %339 : vector<2x1xi1> to vector<2x1xi1>
    %344 = vector.broadcast %343 : vector<2x1xi1> to vector<2x32xi1>
    %345 = arith.select %344, %335, %307 : vector<2x32xi1>, vector<2x32xf32>
    %c8_i32 = arith.constant 8 : i32
    %c0_76 = arith.constant 0 : index
    %c0_77 = arith.constant 0 : index
    %346 = vector.load %arg5[%c0_76, %c0_77] : memref<32x2xf32, #tpu.memory_space<vmem>>, vector<32x2xf32>
    %cst_78 = arith.constant dense<0.000000e+00> : vector<2x2xf32>
    %347 = tpu.matmul %342, %346, %cst_78 {dimension_numbers = #tpu.dot_dimension_numbers<[1], [0], [0], [1], [0, 0, 1, 1], [], []>} : vector<2x32xf32>, vector<32x2xf32>, vector<2x2xf32> -> vector<2x2xf32>
    %c0_79 = arith.constant 0 : index
    %c0_80 = arith.constant 0 : index
    %348 = vector.load %arg6[%c0_79, %c0_80] : memref<1x2xf32, #tpu.memory_space<vmem>>, vector<1x2xf32>
    %349 = vector.broadcast %348 : vector<1x2xf32> to vector<2x2xf32>
    %350 = arith.addf %347, %349 : vector<2x2xf32>
    %c0_81 = arith.constant 0 : index
    %c0_82 = arith.constant 0 : index
    %351 = vector.load %arg7[%c0_81, %c0_82] : memref<2x2xf32, #tpu.memory_space<vmem>>, vector<2x2xf32>
    tpu.vector_store %arg7[%c0_81, %c0_82], %350 {strides = array<i32>} : memref<2x2xf32, #tpu.memory_space<vmem>>, vector<2x2xf32>,
    return
  }
}

</mosaic_0001>

<llo_original>
// kernel: tpu_custom_call.1
$region0: #{tpu_custom_call.1}
  #allocation0 [shape = 'u32[]', space=smem, size = 0x4, offset = 0x4, fixed_abs, tag = 'smem constant byte address 0x4 - core index']
  #allocation1 [shape = 'u32[144,128]{1,0:T(1,128)}', space=vmem, size = 0x12000, scoped, tag = 'internal scratch']
  #allocation2 [shape = 'f32[8,2,128]{2,1,0:T(2,128)}', space=vmem, size = 0x2000, scoped, tag = 'scratch operand']
  %s0 = inlined_call_operand.hbm [shape: f32[16,16], index: 0, kind: input, shape index: {}]
  %s1 = inlined_call_operand.vmem [shape: s32[2,1], index: 1, kind: input, shape index: {}]
  %s2 = inlined_call_operand.hbm [shape: f32[16,128], index: 2, kind: input, shape index: {}]
  %s3 = inlined_call_operand.vmem [shape: f32[32,128], index: 3, kind: input, shape index: {}]
  %s4 = inlined_call_operand.vmem [shape: f32[1,128], index: 4, kind: input, shape index: {}]
  %s5 = inlined_call_operand.vmem [shape: f32[32,2], index: 5, kind: input, shape index: {}]
  %s6 = inlined_call_operand.vmem [shape: f32[1,2], index: 6, kind: input, shape index: {}]
  %s7 = inlined_call_operand.hbm [shape: f32[2,2], index: 7, kind: output, shape index: {}]
  %s8 = sld [smem:[#allocation0]]
  $region46: #{tpu_custom_call.1} parent=0
    _
  %s10 = ssub.s32 1, %s8
  %s11 = scalar_select 0, %s10, %s8
  $region1: #{tpu_custom_call.1} parent=0
    #allocation3 [shape = 'u8[8192]{0}', space=vmem, size = 0x2000, scoped, tag = 'input window, operand 0, single buffered']
    #allocation4 [shape = 's32[1]{0}', space=sflag, size = 0x4, scoped, tag = 'scoped memory for tpu_custom_call.1']
    #allocation5 [shape = 's32[1]{0}', space=sflag, size = 0x4, scoped, tag = 'scoped memory for tpu_custom_call.1']
    #allocation6 [shape = 'u8[8192]{0}', space=vmem, size = 0x2000, scoped, tag = 'input window, operand 2, single buffered']
    #allocation7 [shape = 's32[1]{0}', space=sflag, size = 0x4, scoped, tag = 'scoped memory for tpu_custom_call.1']
    #allocation8 [shape = 'u8[1024]{0}', space=vmem, size = 0x400, scoped, tag = 'output window, operand 0, single buffered']
    %12 = vsyncpa [#allocation4], 0
    %13 = vsyncpa [#allocation7], 0
    %14 = vsyncpa [#allocation5], 0
    // Predicated region
    $region2: #{tpu_custom_call.1} parent=1 // pred_check
      _
    $region3: #{tpu_custom_call.1} parent=1 // pred_check_branch
      %16 = sbr.rel (0) target = $region5
    $region4: #{tpu_custom_call.1} parent=1 // pred_region
      %s18 = ssub.s32 256, 256
      %19 = vsyncadd [#allocation4], %s18
      %s20 = sshll.u32 [#allocation3], 4
      %s21 = int_to_ptr.vmem [resolvable:$true] %s20
      %26 = dma.hbm_to_vmem [thread:$0]  %s0, 256, %s21, [#allocation4], 128, 128, 8
    $region5: #{tpu_custom_call.1} parent=1 // pred_fallthru
      _
    // Predicated region
    $region6: #{tpu_custom_call.1} parent=1 // pred_check
      _
    $region7: #{tpu_custom_call.1} parent=1 // pred_check_branch
      %28 = sbr.rel (0) target = $region9
    $region8: #{tpu_custom_call.1} parent=1 // pred_region
      _
    $region9: #{tpu_custom_call.1} parent=1 // pred_fallthru
      _
    // Predicated region
    $region10: #{tpu_custom_call.1} parent=1 // pred_check
      _
    $region11: #{tpu_custom_call.1} parent=1 // pred_check_branch
      %30 = sbr.rel (0) target = $region13
    $region12: #{tpu_custom_call.1} parent=1 // pred_region
      %s32 = ssub.s32 256, 256
      %33 = vsyncadd [#allocation7], %s32
      %s34 = sshll.u32 [#allocation6], 4
      %s35 = int_to_ptr.vmem [resolvable:$true] %s34
      %40 = dma.hbm_to_vmem [thread:$0]  %s2, 256, %s35, [#allocation7], 128, 128, 8
    $region13: #{tpu_custom_call.1} parent=1 // pred_fallthru
      _
    // Predicated region
    $region14: #{tpu_custom_call.1} parent=1 // pred_check
      _
    $region15: #{tpu_custom_call.1} parent=1 // pred_check_branch
      %42 = sbr.rel (0) target = $region17
    $region16: #{tpu_custom_call.1} parent=1 // pred_region
      _
    $region17: #{tpu_custom_call.1} parent=1 // pred_fallthru
      _
    // Predicated region
    $region18: #{tpu_custom_call.1} parent=1 // pred_check
      _
    $region19: #{tpu_custom_call.1} parent=1 // pred_check_branch
      %44 = sbr.rel (0) target = $region21
    $region20: #{tpu_custom_call.1} parent=1 // pred_region
      _
    $region21: #{tpu_custom_call.1} parent=1 // pred_fallthru
      _
    // Predicated region
    $region22: #{tpu_custom_call.1} parent=1 // pred_check
      _
    $region23: #{tpu_custom_call.1} parent=1 // pred_check_branch
      %46 = sbr.rel (0) target = $region25
    $region24: #{tpu_custom_call.1} parent=1 // pred_region
      _
    $region25: #{tpu_custom_call.1} parent=1 // pred_fallthru
      _
    // Predicated region
    $region26: #{tpu_custom_call.1} parent=1 // pred_check
      _
    $region27: #{tpu_custom_call.1} parent=1 // pred_check_branch
      %48 = sbr.rel (0) target = $region29
    $region28: #{tpu_custom_call.1} parent=1 // pred_region
      _
    $region29: #{tpu_custom_call.1} parent=1 // pred_fallthru
      _
    // Predicated region
    $region30: #{tpu_custom_call.1} parent=1 // pred_check
      _
    $region31: #{tpu_custom_call.1} parent=1 // pred_check_branch
      %50 = sbr.rel (0) target = $region33
    $region32: #{tpu_custom_call.1} parent=1 // pred_region
      %51 = dma.done [#allocation4], 256
    $region33: #{tpu_custom_call.1} parent=1 // pred_fallthru
      _
    // Predicated region
    $region34: #{tpu_custom_call.1} parent=1 // pred_check
      _
    $region35: #{tpu_custom_call.1} parent=1 // pred_check_branch
      %53 = sbr.rel (0) target = $region37
    $region36: #{tpu_custom_call.1} parent=1 // pred_region
      %54 = dma.done [#allocation7], 256
    $region37: #{tpu_custom_call.1} parent=1 // pred_fallthru
      _
    %v55 = vld [vmem:[#allocation3] sm:$0xff]
    %v56 = vld [vmem:[#allocation3 + $0x8] sm:$0xff]
    %v57 = vld [vmem:[#allocation6] sm:$0xff]
    %v58 = vld [vmem:[#allocation6 + $0x8] sm:$0xff]
    %v59 = vld [vmem:[%s4] sm:$0x1]
    %v61 = vlaneseq
    %v62 = vshrl.u32 %v61, 7
    %v63 = vsub.s32 0, %v62
    %v64 = vrot.slane %v59, %v63
    %vm66 = vcmask 130048
    %v68 = vsel %vm66, %v55, 0
    %v71 = vsel %vm66, %v56, 0
    %73 = vmatprep.subr.mxu0 0.0
    %74 = vmatpush1.msra.mxu0 0.0
    %75 = vmatprep.subr.mxu0 0.0
    %76 = vmatpush1.msra.mxu0 0.0
    %77 = vmatprep.subr.mxu0 0.0
    %78 = vmatpush1.msra.mxu0 0.0
    %79 = vmatprep.subr.mxu0 0.0
    %80 = vmatpush1.msra.mxu0 0.0
    %81 = vmatprep.subr.mxu0 0.0
    %82 = vmatpush1.msra.mxu0 0.0
    %83 = vmatprep.subr.mxu0 0.0
    %84 = vmatpush1.msra.mxu0 0.0
    %85 = vmatprep.subr.mxu0 0.0
    %86 = vmatpush1.msra.mxu0 0.0
    %87 = vmatprep.subr.mxu0 0.0
    %88 = vmatpush1.msra.mxu0 0.0
    %89 = vmatprep.subr.mxu0 0.0
    %90 = vmatpush1.msra.mxu0 0.0
    %91 = vmatprep.subr.mxu0 0.0
    %92 = vmatpush1.msra.mxu0 0.0
    %93 = vmatprep.subr.mxu0 0.0
    %94 = vmatpush1.msra.mxu0 0.0
    %95 = vmatprep.subr.mxu0 0.0
    %96 = vmatpush1.msra.mxu0 0.0
    %97 = vmatprep.subr.mxu0 0.0
    %98 = vmatpush1.msra.mxu0 0.0
    %99 = vmatprep.subr.mxu0 0.0
    %100 = vmatpush1.msra.mxu0 0.0
    %101 = vmatprep.subr.mxu0 0.0
    %102 = vmatpush1.msra.mxu0 %v58
    %103 = vmatprep.subr.mxu0 0.0
    %104 = vmatpush1.msra.mxu0 %v57
    %105 = vmatprep.subr.mxu0 0.0
    %106 = vmatpush2.msra.mxu0 0.0
    %107 = vmatprep.subr.mxu0 0.0
    %108 = vmatpush2.msra.mxu0 0.0
    %109 = vmatprep.subr.mxu0 0.0
    %110 = vmatpush2.msra.mxu0 0.0
    %111 = vmatprep.subr.mxu0 0.0
    %112 = vmatpush2.msra.mxu0 0.0
    %113 = vmatprep.subr.mxu0 0.0
    %114 = vmatpush2.msra.mxu0 0.0
    %115 = vmatprep.subr.mxu0 0.0
    %116 = vmatpush2.msra.mxu0 0.0
    %117 = vmatprep.subr.mxu0 0.0
    %118 = vmatpush2.msra.mxu0 0.0
    %119 = vmatprep.subr.mxu0 0.0
    %120 = vmatpush2.msra.mxu0 0.0
    %121 = vmatprep.subr.mxu0 0.0
    %122 = vmatpush2.msra.mxu0 0.0
    %123 = vmatprep.subr.mxu0 0.0
    %124 = vmatpush2.msra.mxu0 0.0
    %125 = vmatprep.subr.mxu0 0.0
    %126 = vmatpush2.msra.mxu0 0.0
    %127 = vmatprep.subr.mxu0 0.0
    %128 = vmatpush2.msra.mxu0 0.0
    %129 = vmatprep.subr.mxu0 0.0
    %130 = vmatpush2.msra.mxu0 0.0
    %131 = vmatprep.subr.mxu0 0.0
    %132 = vmatpush2.msra.mxu0 0.0
    %133 = vmatprep.subr.mxu0 0.0
    %134 = vmatpush2.msra.mxu0 0.0
    %135 = vmatprep.subr.mxu0 0.0
    %136 = vmatpush2.msra.mxu0 0.0
    %137 = vmatprep.mubr.f32.mxu0 0.0
    %138 = vmatmul.mubr.f32.gmra.mxu0 %v68
    %v139 = vpop.f32.mrf.mxu0
    %v140 = vadd.f32 %v64, %v139
    %v141 = vpop.f32.mrf.mxu0
    %142 = vmatprep.mubr.f32.mxu0 0.0
    %143 = vmatmul.mubr.f32.gmra.mxu0 %v71
    %v144 = vpop.f32.mrf.mxu0
    %v145 = vadd.f32 %v64, %v144
    %v146 = vpop.f32.mrf.mxu0
    %147 = vdwg.mxu0
    %148 = vst [vmem:[#allocation2] sm:$0x3] %v140
    %s149 = scalar_lea.vmem [#allocation2], 2
    %150 = vst [vmem:[%s149 - $0x2] sm:$0xc] %v140
    %s151 = scalar_lea.vmem [#allocation2], 4
    %152 = vst [vmem:[%s151 - $0x4] sm:$0x30] %v140
    %s153 = scalar_lea.vmem [#allocation2], 6
    %154 = vst [vmem:[%s153 - $0x6] sm:$0xc0] %v140
    %s155 = scalar_lea.vmem [#allocation2], 8
    %156 = vst [vmem:[%s155] sm:$0x3] %v145
    %s157 = scalar_lea.vmem [#allocation2], 10
    %158 = vst [vmem:[%s157 - $0x2] sm:$0xc] %v145
    %s159 = scalar_lea.vmem [#allocation2], 12
    %160 = vst [vmem:[%s159 - $0x4] sm:$0x30] %v145
    %s161 = scalar_lea.vmem [#allocation2], 14
    %162 = vst [vmem:[%s161 - $0x6] sm:$0xc0] %v145
    %v163 = vld [vmem:[%s1] sm:$0x3]
    %v164 = vld [vmem:[%s3] sm:$0xff]
    %v165 = vld [vmem:[%s3 + $0x8] sm:$0xff]
    %v166 = vld [vmem:[%s3 + $0x10] sm:$0xff]
    %v167 = vld [vmem:[%s3 + $0x18] sm:$0xff]
    %v168 = vld [vmem:[#allocation2] sm:$0x3]
    %vm169 = vcmask 261120
    %v171 = vsel %vm169, 0.0, 0
    %173 = vmatprep.subr.mxu0 0.0
    %174 = vmatpush1.msra.mxu0 0.0
    %175 = vmatprep.subr.mxu0 0.0
    %176 = vmatpush1.msra.mxu0 0.0
    %177 = vmatprep.subr.mxu0 0.0
    %178 = vmatpush1.msra.mxu0 0.0
    %179 = vmatprep.subr.mxu0 0.0
    %180 = vmatpush1.msra.mxu0 0.0
    %181 = vmatprep.subr.mxu0 0.0
    %182 = vmatpush1.msra.mxu0 0.0
    %183 = vmatprep.subr.mxu0 0.0
    %184 = vmatpush1.msra.mxu0 0.0
    %185 = vmatprep.subr.mxu0 0.0
    %186 = vmatpush1.msra.mxu0 0.0
    %187 = vmatprep.subr.mxu0 0.0
    %188 = vmatpush1.msra.mxu0 0.0
    %189 = vmatprep.subr.mxu0 0.0
    %190 = vmatpush1.msra.mxu0 0.0
    %191 = vmatprep.subr.mxu0 0.0
    %192 = vmatpush1.msra.mxu0 0.0
    %193 = vmatprep.subr.mxu0 0.0
    %194 = vmatpush1.msra.mxu0 0.0
    %195 = vmatprep.subr.mxu0 0.0
    %196 = vmatpush1.msra.mxu0 0.0
    %197 = vmatprep.subr.mxu0 0.0
    %198 = vmatpush1.msra.mxu0 %v167
    %199 = vmatprep.subr.mxu0 0.0
    %200 = vmatpush1.msra.mxu0 %v166
    %201 = vmatprep.subr.mxu0 0.0
    %202 = vmatpush1.msra.mxu0 %v165
    %203 = vmatprep.subr.mxu0 0.0
    %204 = vmatpush1.msra.mxu0 %v164
    %205 = vmatprep.subr.mxu0 0.0
    %206 = vmatpush2.msra.mxu0 0.0
    %207 = vmatprep.subr.mxu0 0.0
    %208 = vmatpush2.msra.mxu0 0.0
    %209 = vmatprep.subr.mxu0 0.0
    %210 = vmatpush2.msra.mxu0 0.0
    %211 = vmatprep.subr.mxu0 0.0
    %212 = vmatpush2.msra.mxu0 0.0
    %213 = vmatprep.subr.mxu0 0.0
    %214 = vmatpush2.msra.mxu0 0.0
    %215 = vmatprep.subr.mxu0 0.0
    %216 = vmatpush2.msra.mxu0 0.0
    %217 = vmatprep.subr.mxu0 0.0
    %218 = vmatpush2.msra.mxu0 0.0
    %219 = vmatprep.subr.mxu0 0.0
    %220 = vmatpush2.msra.mxu0 0.0
    %221 = vmatprep.subr.mxu0 0.0
    %222 = vmatpush2.msra.mxu0 0.0
    %223 = vmatprep.subr.mxu0 0.0
    %224 = vmatpush2.msra.mxu0 0.0
    %225 = vmatprep.subr.mxu0 0.0
    %226 = vmatpush2.msra.mxu0 0.0
    %227 = vmatprep.subr.mxu0 0.0
    %228 = vmatpush2.msra.mxu0 0.0
    %229 = vmatprep.subr.mxu0 0.0
    %230 = vmatpush2.msra.mxu0 0.0
    %231 = vmatprep.subr.mxu0 0.0
    %232 = vmatpush2.msra.mxu0 0.0
    %233 = vmatprep.subr.mxu0 0.0
    %234 = vmatpush2.msra.mxu0 0.0
    %235 = vmatprep.subr.mxu0 0.0
    %236 = vmatpush2.msra.mxu0 0.0
    %237 = vmatprep.mubr.f32.mxu0 0.0
    %238 = vmatmul.mubr.f32.gmra.mxu0 %v171
    %v239 = vpop.f32.mrf.mxu0
    %v240 = vadd.f32 0.0, %v239
    %v241 = vpop.f32.mrf.mxu0
    %242 = vdwg.mxu0
    %v243 = vadd.f32 %v168, %v240
    %v244 = vxor.u32 %v243, 2147483648
    %v245 = vmul.f32 %v244, 1.442695
    %v246 = vpow.pop %v245
    %v247 = vadd.f32 %v246, 1.0
    %v248 = vrcp.pop %v247
    %v249 = vmul.f32 1.0, %v248
    %v250 = vtanh.pop %v243
    %v251 = vmul.f32 %v249, 0.0
    %253 = vrot.lane.b32.xlu0 %v250, 64
    %v254 = vpop.permute.xlu0 %253
    %v256 = vmul.f32 %v249, %v254
    %258 = vrot.lane.b32.xlu0 %v256, 32
    %v259 = vpop.permute.xlu0 %258
    %v261 = vadd.f32 %v251, %v259
    %v262 = vtanh.pop %v261
    %264 = vrot.lane.b32.xlu0 %v262, 64
    %v265 = vpop.permute.xlu0 %264
    %v267 = vmul.f32 %v249, %v265
    %vm268 = vcmp.gt.s32.totalorder %v163, 0
    %v269 = vsel %vm268, 1, 0
    %270 = vset.pattern.permute.xlu0 0
    %271 = vperm.xlu0 %270, %v269
    %v272 = vpop.permute.xlu0 %271
    %vm273 = vcmp.eq.s32.totalorder %v272, 1
    %v274 = vsel %vm273, %v267, 0.0
    %v275 = vsel %vm273, %v261, 0.0
    %v276 = vld [vmem:[%s149] sm:$0x3]
    %278 = vrot.lane.b32.xlu0 %v274, 32
    %v279 = vpop.permute.xlu0 %278
    %v280 = vsel %vm169, %v279, 0
    %282 = vmatprep.subr.mxu0 0.0
    %283 = vmatpush1.msra.mxu0 0.0
    %284 = vmatprep.subr.mxu0 0.0
    %285 = vmatpush1.msra.mxu0 0.0
    %286 = vmatprep.subr.mxu0 0.0
    %287 = vmatpush1.msra.mxu0 0.0
    %288 = vmatprep.subr.mxu0 0.0
    %289 = vmatpush1.msra.mxu0 0.0
    %290 = vmatprep.subr.mxu0 0.0
    %291 = vmatpush1.msra.mxu0 0.0
    %292 = vmatprep.subr.mxu0 0.0
    %293 = vmatpush1.msra.mxu0 0.0
    %294 = vmatprep.subr.mxu0 0.0
    %295 = vmatpush1.msra.mxu0 0.0
    %296 = vmatprep.subr.mxu0 0.0
    %297 = vmatpush1.msra.mxu0 0.0
    %298 = vmatprep.subr.mxu0 0.0
    %299 = vmatpush1.msra.mxu0 0.0
    %300 = vmatprep.subr.mxu0 0.0
    %301 = vmatpush1.msra.mxu0 0.0
    %302 = vmatprep.subr.mxu0 0.0
    %303 = vmatpush1.msra.mxu0 0.0
    %304 = vmatprep.subr.mxu0 0.0
    %305 = vmatpush1.msra.mxu0 0.0
    %306 = vmatprep.subr.mxu0 0.0
    %307 = vmatpush1.msra.mxu0 %v167
    %308 = vmatprep.subr.mxu0 0.0
    %309 = vmatpush1.msra.mxu0 %v166
    %310 = vmatprep.subr.mxu0 0.0
    %311 = vmatpush1.msra.mxu0 %v165
    %312 = vmatprep.subr.mxu0 0.0
    %313 = vmatpush1.msra.mxu0 %v164
    %314 = vmatprep.subr.mxu0 0.0
    %315 = vmatpush2.msra.mxu0 0.0
    %316 = vmatprep.subr.mxu0 0.0
    %317 = vmatpush2.msra.mxu0 0.0
    %318 = vmatprep.subr.mxu0 0.0
    %319 = vmatpush2.msra.mxu0 0.0
    %320 = vmatprep.subr.mxu0 0.0
    %321 = vmatpush2.msra.mxu0 0.0
    %322 = vmatprep.subr.mxu0 0.0
    %323 = vmatpush2.msra.mxu0 0.0
    %324 = vmatprep.subr.mxu0 0.0
    %325 = vmatpush2.msra.mxu0 0.0
    %326 = vmatprep.subr.mxu0 0.0
    %327 = vmatpush2.msra.mxu0 0.0
    %328 = vmatprep.subr.mxu0 0.0
    %329 = vmatpush2.msra.mxu0 0.0
    %330 = vmatprep.subr.mxu0 0.0
    %331 = vmatpush2.msra.mxu0 0.0
    %332 = vmatprep.subr.mxu0 0.0
    %333 = vmatpush2.msra.mxu0 0.0
    %334 = vmatprep.subr.mxu0 0.0
    %335 = vmatpush2.msra.mxu0 0.0
    %336 = vmatprep.subr.mxu0 0.0
    %337 = vmatpush2.msra.mxu0 0.0
    %338 = vmatprep.subr.mxu0 0.0
    %339 = vmatpush2.msra.mxu0 0.0
    %340 = vmatprep.subr.mxu0 0.0
    %341 = vmatpush2.msra.mxu0 0.0
    %342 = vmatprep.subr.mxu0 0.0
    %343 = vmatpush2.msra.mxu0 0.0
    %344 = vmatprep.subr.mxu0 0.0
    %345 = vmatpush2.msra.mxu0 0.0
    %346 = vmatprep.mubr.f32.mxu0 0.0
    %347 = vmatmul.mubr.f32.gmra.mxu0 %v280
    %v348 = vpop.f32.mrf.mxu0
    %v349 = vadd.f32 0.0, %v348
    %v350 = vpop.f32.mrf.mxu0
    %351 = vdwg.mxu0
    %v352 = vadd.f32 %v276, %v349
    %v353 = vxor.u32 %v352, 2147483648
    %v354 = vmul.f32 %v353, 1.442695
    %v355 = vpow.pop %v354
    %v356 = vadd.f32 %v355, 1.0
    %v357 = vrcp.pop %v356
    %v358 = vmul.f32 1.0, %v357
    %v359 = vtanh.pop %v352
    %v360 = vmul.f32 %v358, %v275
    %362 = vrot.lane.b32.xlu0 %v359, 64
    %v363 = vpop.permute.xlu0 %362
    %v365 = vmul.f32 %v358, %v363
    %367 = vrot.lane.b32.xlu0 %v365, 32
    %v368 = vpop.permute.xlu0 %367
    %v370 = vadd.f32 %v360, %v368
    %v371 = vtanh.pop %v370
    %373 = vrot.lane.b32.xlu0 %v371, 64
    %v374 = vpop.permute.xlu0 %373
    %v376 = vmul.f32 %v358, %v374
    %vm377 = vcmp.gt.s32.totalorder %v163, 1
    %v378 = vsel %vm377, 1, 0
    %379 = vset.pattern.permute.xlu0 0
    %380 = vperm.xlu0 %379, %v378
    %v381 = vpop.permute.xlu0 %380
    %vm382 = vcmp.eq.s32.totalorder %v381, 1
    %v383 = vsel %vm382, %v376, %v274
    %v384 = vsel %vm382, %v370, %v275
    %v385 = vld [vmem:[%s151] sm:$0x3]
    %387 = vrot.lane.b32.xlu0 %v383, 32
    %v388 = vpop.permute.xlu0 %387
    %v389 = vsel %vm169, %v388, 0
    %391 = vmatprep.subr.mxu0 0.0
    %392 = vmatpush1.msra.mxu0 0.0
    %393 = vmatprep.subr.mxu0 0.0
    %394 = vmatpush1.msra.mxu0 0.0
    %395 = vmatprep.subr.mxu0 0.0
    %396 = vmatpush1.msra.mxu0 0.0
    %397 = vmatprep.subr.mxu0 0.0
    %398 = vmatpush1.msra.mxu0 0.0
    %399 = vmatprep.subr.mxu0 0.0
    %400 = vmatpush1.msra.mxu0 0.0
    %401 = vmatprep.subr.mxu0 0.0
    %402 = vmatpush1.msra.mxu0 0.0
    %403 = vmatprep.subr.mxu0 0.0
    %404 = vmatpush1.msra.mxu0 0.0
    %405 = vmatprep.subr.mxu0 0.0
    %406 = vmatpush1.msra.mxu0 0.0
    %407 = vmatprep.subr.mxu0 0.0
    %408 = vmatpush1.msra.mxu0 0.0
    %409 = vmatprep.subr.mxu0 0.0
    %410 = vmatpush1.msra.mxu0 0.0
    %411 = vmatprep.subr.mxu0 0.0
    %412 = vmatpush1.msra.mxu0 0.0
    %413 = vmatprep.subr.mxu0 0.0
    %414 = vmatpush1.msra.mxu0 0.0
    %415 = vmatprep.subr.mxu0 0.0
    %416 = vmatpush1.msra.mxu0 %v167
    %417 = vmatprep.subr.mxu0 0.0
    %418 = vmatpush1.msra.mxu0 %v166
    %419 = vmatprep.subr.mxu0 0.0
    %420 = vmatpush1.msra.mxu0 %v165
    %421 = vmatprep.subr.mxu0 0.0
    %422 = vmatpush1.msra.mxu0 %v164
    %423 = vmatprep.subr.mxu0 0.0
    %424 = vmatpush2.msra.mxu0 0.0
    %425 = vmatprep.subr.mxu0 0.0
    %426 = vmatpush2.msra.mxu0 0.0
    %427 = vmatprep.subr.mxu0 0.0
    %428 = vmatpush2.msra.mxu0 0.0
    %429 = vmatprep.subr.mxu0 0.0
    %430 = vmatpush2.msra.mxu0 0.0
    %431 = vmatprep.subr.mxu0 0.0
    %432 = vmatpush2.msra.mxu0 0.0
    %433 = vmatprep.subr.mxu0 0.0
    %434 = vmatpush2.msra.mxu0 0.0
    %435 = vmatprep.subr.mxu0 0.0
    %436 = vmatpush2.msra.mxu0 0.0
    %437 = vmatprep.subr.mxu0 0.0
    %438 = vmatpush2.msra.mxu0 0.0
    %439 = vmatprep.subr.mxu0 0.0
    %440 = vmatpush2.msra.mxu0 0.0
    %441 = vmatprep.subr.mxu0 0.0
    %442 = vmatpush2.msra.mxu0 0.0
    %443 = vmatprep.subr.mxu0 0.0
    %444 = vmatpush2.msra.mxu0 0.0
    %445 = vmatprep.subr.mxu0 0.0
    %446 = vmatpush2.msra.mxu0 0.0
    %447 = vmatprep.subr.mxu0 0.0
    %448 = vmatpush2.msra.mxu0 0.0
    %449 = vmatprep.subr.mxu0 0.0
    %450 = vmatpush2.msra.mxu0 0.0
    %451 = vmatprep.subr.mxu0 0.0
    %452 = vmatpush2.msra.mxu0 0.0
    %453 = vmatprep.subr.mxu0 0.0
    %454 = vmatpush2.msra.mxu0 0.0
    %455 = vmatprep.mubr.f32.mxu0 0.0
    %456 = vmatmul.mubr.f32.gmra.mxu0 %v389
    %v457 = vpop.f32.mrf.mxu0
    %v458 = vadd.f32 0.0, %v457
    %v459 = vpop.f32.mrf.mxu0
    %460 = vdwg.mxu0
    %v461 = vadd.f32 %v385, %v458
    %v462 = vxor.u32 %v461, 2147483648
    %v463 = vmul.f32 %v462, 1.442695
    %v464 = vpow.pop %v463
    %v465 = vadd.f32 %v464, 1.0
    %v466 = vrcp.pop %v465
    %v467 = vmul.f32 1.0, %v466
    %v468 = vtanh.pop %v461
    %v469 = vmul.f32 %v467, %v384
    %471 = vrot.lane.b32.xlu0 %v468, 64
    %v472 = vpop.permute.xlu0 %471
    %v474 = vmul.f32 %v467, %v472
    %476 = vrot.lane.b32.xlu0 %v474, 32
    %v477 = vpop.permute.xlu0 %476
    %v479 = vadd.f32 %v469, %v477
    %v480 = vtanh.pop %v479
    %482 = vrot.lane.b32.xlu0 %v480, 64
    %v483 = vpop.permute.xlu0 %482
    %v485 = vmul.f32 %v467, %v483
    %vm486 = vcmp.gt.s32.totalorder %v163, 2
    %v487 = vsel %vm486, 1, 0
    %488 = vset.pattern.permute.xlu0 0
    %489 = vperm.xlu0 %488, %v487
    %v490 = vpop.permute.xlu0 %489
    %vm491 = vcmp.eq.s32.totalorder %v490, 1
    %v492 = vsel %vm491, %v485, %v383
    %v493 = vsel %vm491, %v479, %v384
    %v494 = vld [vmem:[%s153] sm:$0x3]
    %496 = vrot.lane.b32.xlu0 %v492, 32
    %v497 = vpop.permute.xlu0 %496
    %v498 = vsel %vm169, %v497, 0
    %500 = vmatprep.subr.mxu0 0.0
    %501 = vmatpush1.msra.mxu0 0.0
    %502 = vmatprep.subr.mxu0 0.0
    %503 = vmatpush1.msra.mxu0 0.0
    %504 = vmatprep.subr.mxu0 0.0
    %505 = vmatpush1.msra.mxu0 0.0
    %506 = vmatprep.subr.mxu0 0.0
    %507 = vmatpush1.msra.mxu0 0.0
    %508 = vmatprep.subr.mxu0 0.0
    %509 = vmatpush1.msra.mxu0 0.0
    %510 = vmatprep.subr.mxu0 0.0
    %511 = vmatpush1.msra.mxu0 0.0
    %512 = vmatprep.subr.mxu0 0.0
    %513 = vmatpush1.msra.mxu0 0.0
    %514 = vmatprep.subr.mxu0 0.0
    %515 = vmatpush1.msra.mxu0 0.0
    %516 = vmatprep.subr.mxu0 0.0
    %517 = vmatpush1.msra.mxu0 0.0
    %518 = vmatprep.subr.mxu0 0.0
    %519 = vmatpush1.msra.mxu0 0.0
    %520 = vmatprep.subr.mxu0 0.0
    %521 = vmatpush1.msra.mxu0 0.0
    %522 = vmatprep.subr.mxu0 0.0
    %523 = vmatpush1.msra.mxu0 0.0
    %524 = vmatprep.subr.mxu0 0.0
    %525 = vmatpush1.msra.mxu0 %v167
    %526 = vmatprep.subr.mxu0 0.0
    %527 = vmatpush1.msra.mxu0 %v166
    %528 = vmatprep.subr.mxu0 0.0
    %529 = vmatpush1.msra.mxu0 %v165
    %530 = vmatprep.subr.mxu0 0.0
    %531 = vmatpush1.msra.mxu0 %v164
    %532 = vmatprep.subr.mxu0 0.0
    %533 = vmatpush2.msra.mxu0 0.0
    %534 = vmatprep.subr.mxu0 0.0
    %535 = vmatpush2.msra.mxu0 0.0
    %536 = vmatprep.subr.mxu0 0.0
    %537 = vmatpush2.msra.mxu0 0.0
    %538 = vmatprep.subr.mxu0 0.0
    %539 = vmatpush2.msra.mxu0 0.0
    %540 = vmatprep.subr.mxu0 0.0
    %541 = vmatpush2.msra.mxu0 0.0
    %542 = vmatprep.subr.mxu0 0.0
    %543 = vmatpush2.msra.mxu0 0.0
    %544 = vmatprep.subr.mxu0 0.0
    %545 = vmatpush2.msra.mxu0 0.0
    %546 = vmatprep.subr.mxu0 0.0
    %547 = vmatpush2.msra.mxu0 0.0
    %548 = vmatprep.subr.mxu0 0.0
    %549 = vmatpush2.msra.mxu0 0.0
    %550 = vmatprep.subr.mxu0 0.0
    %551 = vmatpush2.msra.mxu0 0.0
    %552 = vmatprep.subr.mxu0 0.0
    %553 = vmatpush2.msra.mxu0 0.0
    %554 = vmatprep.subr.mxu0 0.0
    %555 = vmatpush2.msra.mxu0 0.0
    %556 = vmatprep.subr.mxu0 0.0
    %557 = vmatpush2.msra.mxu0 0.0
    %558 = vmatprep.subr.mxu0 0.0
    %559 = vmatpush2.msra.mxu0 0.0
    %560 = vmatprep.subr.mxu0 0.0
    %561 = vmatpush2.msra.mxu0 0.0
    %562 = vmatprep.subr.mxu0 0.0
    %563 = vmatpush2.msra.mxu0 0.0
    %564 = vmatprep.mubr.f32.mxu0 0.0
    %565 = vmatmul.mubr.f32.gmra.mxu0 %v498
    %v566 = vpop.f32.mrf.mxu0
    %v567 = vadd.f32 0.0, %v566
    %v568 = vpop.f32.mrf.mxu0
    %569 = vdwg.mxu0
    %v570 = vadd.f32 %v494, %v567
    %v571 = vxor.u32 %v570, 2147483648
    %v572 = vmul.f32 %v571, 1.442695
    %v573 = vpow.pop %v572
    %v574 = vadd.f32 %v573, 1.0
    %v575 = vrcp.pop %v574
    %v576 = vmul.f32 1.0, %v575
    %v577 = vtanh.pop %v570
    %v578 = vmul.f32 %v576, %v493
    %580 = vrot.lane.b32.xlu0 %v577, 64
    %v581 = vpop.permute.xlu0 %580
    %v583 = vmul.f32 %v576, %v581
    %585 = vrot.lane.b32.xlu0 %v583, 32
    %v586 = vpop.permute.xlu0 %585
    %v588 = vadd.f32 %v578, %v586
    %v589 = vtanh.pop %v588
    %591 = vrot.lane.b32.xlu0 %v589, 64
    %v592 = vpop.permute.xlu0 %591
    %v594 = vmul.f32 %v576, %v592
    %vm595 = vcmp.gt.s32.totalorder %v163, 3
    %v596 = vsel %vm595, 1, 0
    %597 = vset.pattern.permute.xlu0 0
    %598 = vperm.xlu0 %597, %v596
    %v599 = vpop.permute.xlu0 %598
    %vm600 = vcmp.eq.s32.totalorder %v599, 1
    %v601 = vsel %vm600, %v594, %v492
    %v602 = vsel %vm600, %v588, %v493
    %v603 = vld [vmem:[%s155] sm:$0x3]
    %605 = vrot.lane.b32.xlu0 %v601, 32
    %v606 = vpop.permute.xlu0 %605
    %v607 = vsel %vm169, %v606, 0
    %609 = vmatprep.subr.mxu0 0.0
    %610 = vmatpush1.msra.mxu0 0.0
    %611 = vmatprep.subr.mxu0 0.0
    %612 = vmatpush1.msra.mxu0 0.0
    %613 = vmatprep.subr.mxu0 0.0
    %614 = vmatpush1.msra.mxu0 0.0
    %615 = vmatprep.subr.mxu0 0.0
    %616 = vmatpush1.msra.mxu0 0.0
    %617 = vmatprep.subr.mxu0 0.0
    %618 = vmatpush1.msra.mxu0 0.0
    %619 = vmatprep.subr.mxu0 0.0
    %620 = vmatpush1.msra.mxu0 0.0
    %621 = vmatprep.subr.mxu0 0.0
    %622 = vmatpush1.msra.mxu0 0.0
    %623 = vmatprep.subr.mxu0 0.0
    %624 = vmatpush1.msra.mxu0 0.0
    %625 = vmatprep.subr.mxu0 0.0
    %626 = vmatpush1.msra.mxu0 0.0
    %627 = vmatprep.subr.mxu0 0.0
    %628 = vmatpush1.msra.mxu0 0.0
    %629 = vmatprep.subr.mxu0 0.0
    %630 = vmatpush1.msra.mxu0 0.0
    %631 = vmatprep.subr.mxu0 0.0
    %632 = vmatpush1.msra.mxu0 0.0
    %633 = vmatprep.subr.mxu0 0.0
    %634 = vmatpush1.msra.mxu0 %v167
    %635 = vmatprep.subr.mxu0 0.0
    %636 = vmatpush1.msra.mxu0 %v166
    %637 = vmatprep.subr.mxu0 0.0
    %638 = vmatpush1.msra.mxu0 %v165
    %639 = vmatprep.subr.mxu0 0.0
    %640 = vmatpush1.msra.mxu0 %v164
    %641 = vmatprep.subr.mxu0 0.0
    %642 = vmatpush2.msra.mxu0 0.0
    %643 = vmatprep.subr.mxu0 0.0
    %644 = vmatpush2.msra.mxu0 0.0
    %645 = vmatprep.subr.mxu0 0.0
    %646 = vmatpush2.msra.mxu0 0.0
    %647 = vmatprep.subr.mxu0 0.0
    %648 = vmatpush2.msra.mxu0 0.0
    %649 = vmatprep.subr.mxu0 0.0
    %650 = vmatpush2.msra.mxu0 0.0
    %651 = vmatprep.subr.mxu0 0.0
    %652 = vmatpush2.msra.mxu0 0.0
    %653 = vmatprep.subr.mxu0 0.0
    %654 = vmatpush2.msra.mxu0 0.0
    %655 = vmatprep.subr.mxu0 0.0
    %656 = vmatpush2.msra.mxu0 0.0
    %657 = vmatprep.subr.mxu0 0.0
    %658 = vmatpush2.msra.mxu0 0.0
    %659 = vmatprep.subr.mxu0 0.0
    %660 = vmatpush2.msra.mxu0 0.0
    %661 = vmatprep.subr.mxu0 0.0
    %662 = vmatpush2.msra.mxu0 0.0
    %663 = vmatprep.subr.mxu0 0.0
    %664 = vmatpush2.msra.mxu0 0.0
    %665 = vmatprep.subr.mxu0 0.0
    %666 = vmatpush2.msra.mxu0 0.0
    %667 = vmatprep.subr.mxu0 0.0
    %668 = vmatpush2.msra.mxu0 0.0
    %669 = vmatprep.subr.mxu0 0.0
    %670 = vmatpush2.msra.mxu0 0.0
    %671 = vmatprep.subr.mxu0 0.0
    %672 = vmatpush2.msra.mxu0 0.0
    %673 = vmatprep.mubr.f32.mxu0 0.0
    %674 = vmatmul.mubr.f32.gmra.mxu0 %v607
    %v675 = vpop.f32.mrf.mxu0
    %v676 = vadd.f32 0.0, %v675
    %v677 = vpop.f32.mrf.mxu0
    %678 = vdwg.mxu0
    %v679 = vadd.f32 %v603, %v676
    %v680 = vxor.u32 %v679, 2147483648
    %v681 = vmul.f32 %v680, 1.442695
    %v682 = vpow.pop %v681
    %v683 = vadd.f32 %v682, 1.0
    %v684 = vrcp.pop %v683
    %v685 = vmul.f32 1.0, %v684
    %v686 = vtanh.pop %v679
    %v687 = vmul.f32 %v685, %v602
    %689 = vrot.lane.b32.xlu0 %v686, 64
    %v690 = vpop.permute.xlu0 %689
    %v692 = vmul.f32 %v685, %v690
    %694 = vrot.lane.b32.xlu0 %v692, 32
    %v695 = vpop.permute.xlu0 %694
    %v697 = vadd.f32 %v687, %v695
    %v698 = vtanh.pop %v697
    %700 = vrot.lane.b32.xlu0 %v698, 64
    %v701 = vpop.permute.xlu0 %700
    %v703 = vmul.f32 %v685, %v701
    %vm704 = vcmp.gt.s32.totalorder %v163, 4
    %v705 = vsel %vm704, 1, 0
    %706 = vset.pattern.permute.xlu0 0
    %707 = vperm.xlu0 %706, %v705
    %v708 = vpop.permute.xlu0 %707
    %vm709 = vcmp.eq.s32.totalorder %v708, 1
    %v710 = vsel %vm709, %v703, %v601
    %v711 = vsel %vm709, %v697, %v602
    %v712 = vld [vmem:[%s157] sm:$0x3]
    %714 = vrot.lane.b32.xlu0 %v710, 32
    %v715 = vpop.permute.xlu0 %714
    %v716 = vsel %vm169, %v715, 0
    %718 = vmatprep.subr.mxu0 0.0
    %719 = vmatpush1.msra.mxu0 0.0
    %720 = vmatprep.subr.mxu0 0.0
    %721 = vmatpush1.msra.mxu0 0.0
    %722 = vmatprep.subr.mxu0 0.0
    %723 = vmatpush1.msra.mxu0 0.0
    %724 = vmatprep.subr.mxu0 0.0
    %725 = vmatpush1.msra.mxu0 0.0
    %726 = vmatprep.subr.mxu0 0.0
    %727 = vmatpush1.msra.mxu0 0.0
    %728 = vmatprep.subr.mxu0 0.0
    %729 = vmatpush1.msra.mxu0 0.0
    %730 = vmatprep.subr.mxu0 0.0
    %731 = vmatpush1.msra.mxu0 0.0
    %732 = vmatprep.subr.mxu0 0.0
    %733 = vmatpush1.msra.mxu0 0.0
    %734 = vmatprep.subr.mxu0 0.0
    %735 = vmatpush1.msra.mxu0 0.0
    %736 = vmatprep.subr.mxu0 0.0
    %737 = vmatpush1.msra.mxu0 0.0
    %738 = vmatprep.subr.mxu0 0.0
    %739 = vmatpush1.msra.mxu0 0.0
    %740 = vmatprep.subr.mxu0 0.0
    %741 = vmatpush1.msra.mxu0 0.0
    %742 = vmatprep.subr.mxu0 0.0
    %743 = vmatpush1.msra.mxu0 %v167
    %744 = vmatprep.subr.mxu0 0.0
    %745 = vmatpush1.msra.mxu0 %v166
    %746 = vmatprep.subr.mxu0 0.0
    %747 = vmatpush1.msra.mxu0 %v165
    %748 = vmatprep.subr.mxu0 0.0
    %749 = vmatpush1.msra.mxu0 %v164
    %750 = vmatprep.subr.mxu0 0.0
    %751 = vmatpush2.msra.mxu0 0.0
    %752 = vmatprep.subr.mxu0 0.0
    %753 = vmatpush2.msra.mxu0 0.0
    %754 = vmatprep.subr.mxu0 0.0
    %755 = vmatpush2.msra.mxu0 0.0
    %756 = vmatprep.subr.mxu0 0.0
    %757 = vmatpush2.msra.mxu0 0.0
    %758 = vmatprep.subr.mxu0 0.0
    %759 = vmatpush2.msra.mxu0 0.0
    %760 = vmatprep.subr.mxu0 0.0
    %761 = vmatpush2.msra.mxu0 0.0
    %762 = vmatprep.subr.mxu0 0.0
    %763 = vmatpush2.msra.mxu0 0.0
    %764 = vmatprep.subr.mxu0 0.0
    %765 = vmatpush2.msra.mxu0 0.0
    %766 = vmatprep.subr.mxu0 0.0
    %767 = vmatpush2.msra.mxu0 0.0
    %768 = vmatprep.subr.mxu0 0.0
    %769 = vmatpush2.msra.mxu0 0.0
    %770 = vmatprep.subr.mxu0 0.0
    %771 = vmatpush2.msra.mxu0 0.0
    %772 = vmatprep.subr.mxu0 0.0
    %773 = vmatpush2.msra.mxu0 0.0
    %774 = vmatprep.subr.mxu0 0.0
    %775 = vmatpush2.msra.mxu0 0.0
    %776 = vmatprep.subr.mxu0 0.0
    %777 = vmatpush2.msra.mxu0 0.0
    %778 = vmatprep.subr.mxu0 0.0
    %779 = vmatpush2.msra.mxu0 0.0
    %780 = vmatprep.subr.mxu0 0.0
    %781 = vmatpush2.msra.mxu0 0.0
    %782 = vmatprep.mubr.f32.mxu0 0.0
    %783 = vmatmul.mubr.f32.gmra.mxu0 %v716
    %v784 = vpop.f32.mrf.mxu0
    %v785 = vadd.f32 0.0, %v784
    %v786 = vpop.f32.mrf.mxu0
    %787 = vdwg.mxu0
    %v788 = vadd.f32 %v712, %v785
    %v789 = vxor.u32 %v788, 2147483648
    %v790 = vmul.f32 %v789, 1.442695
    %v791 = vpow.pop %v790
    %v792 = vadd.f32 %v791, 1.0
    %v793 = vrcp.pop %v792
    %v794 = vmul.f32 1.0, %v793
    %v795 = vtanh.pop %v788
    %v796 = vmul.f32 %v794, %v711
    %798 = vrot.lane.b32.xlu0 %v795, 64
    %v799 = vpop.permute.xlu0 %798
    %v801 = vmul.f32 %v794, %v799
    %803 = vrot.lane.b32.xlu0 %v801, 32
    %v804 = vpop.permute.xlu0 %803
    %v806 = vadd.f32 %v796, %v804
    %v807 = vtanh.pop %v806
    %809 = vrot.lane.b32.xlu0 %v807, 64
    %v810 = vpop.permute.xlu0 %809
    %v812 = vmul.f32 %v794, %v810
    %vm813 = vcmp.gt.s32.totalorder %v163, 5
    %v814 = vsel %vm813, 1, 0
    %815 = vset.pattern.permute.xlu0 0
    %816 = vperm.xlu0 %815, %v814
    %v817 = vpop.permute.xlu0 %816
    %vm818 = vcmp.eq.s32.totalorder %v817, 1
    %v819 = vsel %vm818, %v812, %v710
    %v820 = vsel %vm818, %v806, %v711
    %v821 = vld [vmem:[%s159] sm:$0x3]
    %823 = vrot.lane.b32.xlu0 %v819, 32
    %v824 = vpop.permute.xlu0 %823
    %v825 = vsel %vm169, %v824, 0
    %827 = vmatprep.subr.mxu0 0.0
    %828 = vmatpush1.msra.mxu0 0.0
    %829 = vmatprep.subr.mxu0 0.0
    %830 = vmatpush1.msra.mxu0 0.0
    %831 = vmatprep.subr.mxu0 0.0
    %832 = vmatpush1.msra.mxu0 0.0
    %833 = vmatprep.subr.mxu0 0.0
    %834 = vmatpush1.msra.mxu0 0.0
    %835 = vmatprep.subr.mxu0 0.0
    %836 = vmatpush1.msra.mxu0 0.0
    %837 = vmatprep.subr.mxu0 0.0
    %838 = vmatpush1.msra.mxu0 0.0
    %839 = vmatprep.subr.mxu0 0.0
    %840 = vmatpush1.msra.mxu0 0.0
    %841 = vmatprep.subr.mxu0 0.0
    %842 = vmatpush1.msra.mxu0 0.0
    %843 = vmatprep.subr.mxu0 0.0
    %844 = vmatpush1.msra.mxu0 0.0
    %845 = vmatprep.subr.mxu0 0.0
    %846 = vmatpush1.msra.mxu0 0.0
    %847 = vmatprep.subr.mxu0 0.0
    %848 = vmatpush1.msra.mxu0 0.0
    %849 = vmatprep.subr.mxu0 0.0
    %850 = vmatpush1.msra.mxu0 0.0
    %851 = vmatprep.subr.mxu0 0.0
    %852 = vmatpush1.msra.mxu0 %v167
    %853 = vmatprep.subr.mxu0 0.0
    %854 = vmatpush1.msra.mxu0 %v166
    %855 = vmatprep.subr.mxu0 0.0
    %856 = vmatpush1.msra.mxu0 %v165
    %857 = vmatprep.subr.mxu0 0.0
    %858 = vmatpush1.msra.mxu0 %v164
    %859 = vmatprep.subr.mxu0 0.0
    %860 = vmatpush2.msra.mxu0 0.0
    %861 = vmatprep.subr.mxu0 0.0
    %862 = vmatpush2.msra.mxu0 0.0
    %863 = vmatprep.subr.mxu0 0.0
    %864 = vmatpush2.msra.mxu0 0.0
    %865 = vmatprep.subr.mxu0 0.0
    %866 = vmatpush2.msra.mxu0 0.0
    %867 = vmatprep.subr.mxu0 0.0
    %868 = vmatpush2.msra.mxu0 0.0
    %869 = vmatprep.subr.mxu0 0.0
    %870 = vmatpush2.msra.mxu0 0.0
    %871 = vmatprep.subr.mxu0 0.0
    %872 = vmatpush2.msra.mxu0 0.0
    %873 = vmatprep.subr.mxu0 0.0
    %874 = vmatpush2.msra.mxu0 0.0
    %875 = vmatprep.subr.mxu0 0.0
    %876 = vmatpush2.msra.mxu0 0.0
    %877 = vmatprep.subr.mxu0 0.0
    %878 = vmatpush2.msra.mxu0 0.0
    %879 = vmatprep.subr.mxu0 0.0
    %880 = vmatpush2.msra.mxu0 0.0
    %881 = vmatprep.subr.mxu0 0.0
    %882 = vmatpush2.msra.mxu0 0.0
    %883 = vmatprep.subr.mxu0 0.0
    %884 = vmatpush2.msra.mxu0 0.0
    %885 = vmatprep.subr.mxu0 0.0
    %886 = vmatpush2.msra.mxu0 0.0
    %887 = vmatprep.subr.mxu0 0.0
    %888 = vmatpush2.msra.mxu0 0.0
    %889 = vmatprep.subr.mxu0 0.0
    %890 = vmatpush2.msra.mxu0 0.0
    %891 = vmatprep.mubr.f32.mxu0 0.0
    %892 = vmatmul.mubr.f32.gmra.mxu0 %v825
    %v893 = vpop.f32.mrf.mxu0
    %v894 = vadd.f32 0.0, %v893
    %v895 = vpop.f32.mrf.mxu0
    %896 = vdwg.mxu0
    %v897 = vadd.f32 %v821, %v894
    %v898 = vxor.u32 %v897, 2147483648
    %v899 = vmul.f32 %v898, 1.442695
    %v900 = vpow.pop %v899
    %v901 = vadd.f32 %v900, 1.0
    %v902 = vrcp.pop %v901
    %v903 = vmul.f32 1.0, %v902
    %v904 = vtanh.pop %v897
    %v905 = vmul.f32 %v903, %v820
    %907 = vrot.lane.b32.xlu0 %v904, 64
    %v908 = vpop.permute.xlu0 %907
    %v910 = vmul.f32 %v903, %v908
    %912 = vrot.lane.b32.xlu0 %v910, 32
    %v913 = vpop.permute.xlu0 %912
    %v915 = vadd.f32 %v905, %v913
    %v916 = vtanh.pop %v915
    %918 = vrot.lane.b32.xlu0 %v916, 64
    %v919 = vpop.permute.xlu0 %918
    %v921 = vmul.f32 %v903, %v919
    %vm922 = vcmp.gt.s32.totalorder %v163, 6
    %v923 = vsel %vm922, 1, 0
    %924 = vset.pattern.permute.xlu0 0
    %925 = vperm.xlu0 %924, %v923
    %v926 = vpop.permute.xlu0 %925
    %vm927 = vcmp.eq.s32.totalorder %v926, 1
    %v928 = vsel %vm927, %v921, %v819
    %v929 = vsel %vm927, %v915, %v820
    %v930 = vld [vmem:[%s161] sm:$0x3]
    %932 = vrot.lane.b32.xlu0 %v928, 32
    %v933 = vpop.permute.xlu0 %932
    %v934 = vsel %vm169, %v933, 0
    %936 = vmatprep.subr.mxu0 0.0
    %937 = vmatpush1.msra.mxu0 0.0
    %938 = vmatprep.subr.mxu0 0.0
    %939 = vmatpush1.msra.mxu0 0.0
    %940 = vmatprep.subr.mxu0 0.0
    %941 = vmatpush1.msra.mxu0 0.0
    %942 = vmatprep.subr.mxu0 0.0
    %943 = vmatpush1.msra.mxu0 0.0
    %944 = vmatprep.subr.mxu0 0.0
    %945 = vmatpush1.msra.mxu0 0.0
    %946 = vmatprep.subr.mxu0 0.0
    %947 = vmatpush1.msra.mxu0 0.0
    %948 = vmatprep.subr.mxu0 0.0
    %949 = vmatpush1.msra.mxu0 0.0
    %950 = vmatprep.subr.mxu0 0.0
    %951 = vmatpush1.msra.mxu0 0.0
    %952 = vmatprep.subr.mxu0 0.0
    %953 = vmatpush1.msra.mxu0 0.0
    %954 = vmatprep.subr.mxu0 0.0
    %955 = vmatpush1.msra.mxu0 0.0
    %956 = vmatprep.subr.mxu0 0.0
    %957 = vmatpush1.msra.mxu0 0.0
    %958 = vmatprep.subr.mxu0 0.0
    %959 = vmatpush1.msra.mxu0 0.0
    %960 = vmatprep.subr.mxu0 0.0
    %961 = vmatpush1.msra.mxu0 %v167
    %962 = vmatprep.subr.mxu0 0.0
    %963 = vmatpush1.msra.mxu0 %v166
    %964 = vmatprep.subr.mxu0 0.0
    %965 = vmatpush1.msra.mxu0 %v165
    %966 = vmatprep.subr.mxu0 0.0
    %967 = vmatpush1.msra.mxu0 %v164
    %968 = vmatprep.subr.mxu0 0.0
    %969 = vmatpush2.msra.mxu0 0.0
    %970 = vmatprep.subr.mxu0 0.0
    %971 = vmatpush2.msra.mxu0 0.0
    %972 = vmatprep.subr.mxu0 0.0
    %973 = vmatpush2.msra.mxu0 0.0
    %974 = vmatprep.subr.mxu0 0.0
    %975 = vmatpush2.msra.mxu0 0.0
    %976 = vmatprep.subr.mxu0 0.0
    %977 = vmatpush2.msra.mxu0 0.0
    %978 = vmatprep.subr.mxu0 0.0
    %979 = vmatpush2.msra.mxu0 0.0
    %980 = vmatprep.subr.mxu0 0.0
    %981 = vmatpush2.msra.mxu0 0.0
    %982 = vmatprep.subr.mxu0 0.0
    %983 = vmatpush2.msra.mxu0 0.0
    %984 = vmatprep.subr.mxu0 0.0
    %985 = vmatpush2.msra.mxu0 0.0
    %986 = vmatprep.subr.mxu0 0.0
    %987 = vmatpush2.msra.mxu0 0.0
    %988 = vmatprep.subr.mxu0 0.0
    %989 = vmatpush2.msra.mxu0 0.0
    %990 = vmatprep.subr.mxu0 0.0
    %991 = vmatpush2.msra.mxu0 0.0
    %992 = vmatprep.subr.mxu0 0.0
    %993 = vmatpush2.msra.mxu0 0.0
    %994 = vmatprep.subr.mxu0 0.0
    %995 = vmatpush2.msra.mxu0 0.0
    %996 = vmatprep.subr.mxu0 0.0
    %997 = vmatpush2.msra.mxu0 0.0
    %998 = vmatprep.subr.mxu0 0.0
    %999 = vmatpush2.msra.mxu0 0.0
    %1000 = vmatprep.mubr.f32.mxu0 0.0
    %1001 = vmatmul.mubr.f32.gmra.mxu0 %v934
    %v1002 = vpop.f32.mrf.mxu0
    %v1003 = vadd.f32 0.0, %v1002
    %v1004 = vpop.f32.mrf.mxu0
    %1005 = vdwg.mxu0
    %v1006 = vadd.f32 %v930, %v1003
    %v1007 = vxor.u32 %v1006, 2147483648
    %v1008 = vmul.f32 %v1007, 1.442695
    %v1009 = vpow.pop %v1008
    %v1010 = vadd.f32 %v1009, 1.0
    %v1011 = vrcp.pop %v1010
    %v1012 = vmul.f32 1.0, %v1011
    %v1013 = vtanh.pop %v1006
    %v1014 = vmul.f32 %v1012, %v929
    %1016 = vrot.lane.b32.xlu0 %v1013, 64
    %v1017 = vpop.permute.xlu0 %1016
    %v1019 = vmul.f32 %v1012, %v1017
    %1021 = vrot.lane.b32.xlu0 %v1019, 32
    %v1022 = vpop.permute.xlu0 %1021
    %v1024 = vadd.f32 %v1014, %v1022
    %v1025 = vtanh.pop %v1024
    %1027 = vrot.lane.b32.xlu0 %v1025, 64
    %v1028 = vpop.permute.xlu0 %1027
    %v1030 = vmul.f32 %v1012, %v1028
    %vm1031 = vcmp.gt.s32.totalorder %v163, 7
    %v1032 = vsel %vm1031, 1, 0
    %1033 = vset.pattern.permute.xlu0 0
    %1034 = vperm.xlu0 %1033, %v1032
    %v1035 = vpop.permute.xlu0 %1034
    %vm1036 = vcmp.eq.s32.totalorder %v1035, 1
    %v1037 = vsel %vm1036, %v1030, %v928
    %v1038 = vld [vmem:[%s5] sm:$0xff]
    %v1039 = vld [vmem:[%s5 + $0x8] sm:$0xff]
    %v1040 = vld [vmem:[%s5 + $0x10] sm:$0xff]
    %v1041 = vld [vmem:[%s5 + $0x18] sm:$0xff]
    %v1042 = vld [vmem:[%s6] sm:$0x1]
    %v1044 = vlaneseq
    %v1045 = vshrl.u32 %v1044, 7
    %v1046 = vsub.s32 0, %v1045
    %v1047 = vrot.slane %v1042, %v1046
    %1050 = vrot.lane.b32.xlu0 %v1037, 32
    %v1051 = vpop.permute.xlu0 %1050
    %v1052 = vsel %vm169, %v1051, 0
    %1054 = vmatprep.subr.mxu0 0.0
    %1055 = vmatpush1.msra.mxu0 0.0
    %1056 = vmatprep.subr.mxu0 0.0
    %1057 = vmatpush1.msra.mxu0 0.0
    %1058 = vmatprep.subr.mxu0 0.0
    %1059 = vmatpush1.msra.mxu0 0.0
    %1060 = vmatprep.subr.mxu0 0.0
    %1061 = vmatpush1.msra.mxu0 0.0
    %1062 = vmatprep.subr.mxu0 0.0
    %1063 = vmatpush1.msra.mxu0 0.0
    %1064 = vmatprep.subr.mxu0 0.0
    %1065 = vmatpush1.msra.mxu0 0.0
    %1066 = vmatprep.subr.mxu0 0.0
    %1067 = vmatpush1.msra.mxu0 0.0
    %1068 = vmatprep.subr.mxu0 0.0
    %1069 = vmatpush1.msra.mxu0 0.0
    %1070 = vmatprep.subr.mxu0 0.0
    %1071 = vmatpush1.msra.mxu0 0.0
    %1072 = vmatprep.subr.mxu0 0.0
    %1073 = vmatpush1.msra.mxu0 0.0
    %1074 = vmatprep.subr.mxu0 0.0
    %1075 = vmatpush1.msra.mxu0 0.0
    %1076 = vmatprep.subr.mxu0 0.0
    %1077 = vmatpush1.msra.mxu0 0.0
    %1078 = vmatprep.subr.mxu0 0.0
    %1079 = vmatpush1.msra.mxu0 %v1041
    %1080 = vmatprep.subr.mxu0 0.0
    %1081 = vmatpush1.msra.mxu0 %v1040
    %1082 = vmatprep.subr.mxu0 0.0
    %1083 = vmatpush1.msra.mxu0 %v1039
    %1084 = vmatprep.subr.mxu0 0.0
    %1085 = vmatpush1.msra.mxu0 %v1038
    %1086 = vmatprep.subr.mxu0 0.0
    %1087 = vmatpush2.msra.mxu0 0.0
    %1088 = vmatprep.subr.mxu0 0.0
    %1089 = vmatpush2.msra.mxu0 0.0
    %1090 = vmatprep.subr.mxu0 0.0
    %1091 = vmatpush2.msra.mxu0 0.0
    %1092 = vmatprep.subr.mxu0 0.0
    %1093 = vmatpush2.msra.mxu0 0.0
    %1094 = vmatprep.subr.mxu0 0.0
    %1095 = vmatpush2.msra.mxu0 0.0
    %1096 = vmatprep.subr.mxu0 0.0
    %1097 = vmatpush2.msra.mxu0 0.0
    %1098 = vmatprep.subr.mxu0 0.0
    %1099 = vmatpush2.msra.mxu0 0.0
    %1100 = vmatprep.subr.mxu0 0.0
    %1101 = vmatpush2.msra.mxu0 0.0
    %1102 = vmatprep.subr.mxu0 0.0
    %1103 = vmatpush2.msra.mxu0 0.0
    %1104 = vmatprep.subr.mxu0 0.0
    %1105 = vmatpush2.msra.mxu0 0.0
    %1106 = vmatprep.subr.mxu0 0.0
    %1107 = vmatpush2.msra.mxu0 0.0
    %1108 = vmatprep.subr.mxu0 0.0
    %1109 = vmatpush2.msra.mxu0 0.0
    %1110 = vmatprep.subr.mxu0 0.0
    %1111 = vmatpush2.msra.mxu0 0.0
    %1112 = vmatprep.subr.mxu0 0.0
    %1113 = vmatpush2.msra.mxu0 0.0
    %1114 = vmatprep.subr.mxu0 0.0
    %1115 = vmatpush2.msra.mxu0 0.0
    %1116 = vmatprep.subr.mxu0 0.0
    %1117 = vmatpush2.msra.mxu0 0.0
    %1118 = vmatprep.mubr.f32.mxu0 0.0
    %1119 = vmatmul.mubr.f32.gmra.mxu0 %v1052
    %v1120 = vpop.f32.mrf.mxu0
    %v1121 = vadd.f32 %v1047, %v1120
    %v1122 = vpop.f32.mrf.mxu0
    %1123 = vdwg.mxu0
    %vm1124 = vcmask 9216
    %1125 = vst.msk [vmem:[#allocation8] sm:$0x3] %vm1124, %v1121
    // Predicated region
    $region38: #{tpu_custom_call.1} parent=1 // pred_check
      _
    $region39: #{tpu_custom_call.1} parent=1 // pred_check_branch
      %1127 = sbr.rel (0) target = $region41
    $region40: #{tpu_custom_call.1} parent=1 // pred_region
      %s1129 = ssub.s32 32, 32
      %1130 = vsyncadd [#allocation5], %s1129
      %s1132 = sshll.u32 [#allocation8], 4
      %s1133 = int_to_ptr.vmem [resolvable:$true] %s1132
      %1135 = dma.vmem_to_hbm [thread:$0]  %s1133, 32, %s7, [#allocation5]
    $region41: #{tpu_custom_call.1} parent=1 // pred_fallthru
      _
    // Predicated region
    $region42: #{tpu_custom_call.1} parent=1 // pred_check
      _
    $region43: #{tpu_custom_call.1} parent=1 // pred_check_branch
      %1137 = sbr.rel (0) target = $region45
    $region44: #{tpu_custom_call.1} parent=1 // pred_region
      %1138 = dma.done [#allocation5], 32
    $region45: #{tpu_custom_call.1} parent=1 // pred_fallthru
      _
    %1139 = vsyncpa [#allocation4], 1
    %1140 = vsyncpa [#allocation7], 1
    %1141 = vsyncpa [#allocation5], 1

</llo_original>
